<compile_context>
chip_gen: v7x
topology: tpu7x:2x2x1
jax: 0.10.0
libtpu: 0.0.40
codegen_flags: <defaults>
</compile_context>

<pallas_src>
import functools

import jax
import jax.numpy as jnp
from jax.experimental import pallas as pl
from jax.experimental.pallas import tpu as pltpu

LANE = 128
NEG_BIG = -1e30  # pad value for unused logit lanes (ignored by log-softmax)


def _round_up(x, m):
    return (x + m - 1) // m * m


def _vmem_budget_bytes():
    """~60% of physical per-core VMEM (64 MiB v7x assumed if query fails)."""
    phys = 64 * 1024 * 1024  # v7x per-TensorCore VMEM — smallest of v5e/v6e/v7x
    try:
        cap = getattr(pltpu.get_tpu_info(), "vmem_capacity_bytes", None)
        if cap:
            phys = int(cap)
    except Exception:
        pass
    return int(0.6 * phys)


def _vmem_estimate(bt, S, E, kernel_sizes, f_pad, out_pad, x_bytes, w_bytes):
    """Rough VMEM-use estimate for one grid step at batch tile `bt`."""
    n_ks = len(kernel_sizes)
    fs_max = max(kernel_sizes)
    L_max = S + 1 - min(kernel_sizes)
    est = 2 * S * bt * E * x_bytes                    # double-buffered x block
    est += L_max * bt * fs_max * E * x_bytes          # largest live im2col window
    est += L_max * bt * f_pad * 4                     # conv output (f32)
    est += n_ks * bt * f_pad * 4                      # pooled features
    w = sum(fs * E * f_pad for fs in kernel_sizes) * w_bytes   # conv weights
    w += n_ks * f_pad * 4                             # conv bias
    w += n_ks * f_pad * out_pad * w_bytes             # fc weight
    w += out_pad * 4                                  # fc bias
    est += 2 * w                                      # invariant blocks still 2x buffered
    est += 2 * bt * out_pad * 4                       # double-buffered output block
    return est


def _choose_b_tile(requested, B, gran, est_fn, budget):
    b_ceil = _round_up(B, gran)
    bt = max(gran, min(_round_up(requested, gran), b_ceil))
    # Guarantee >= 2 grid steps when the batch allows it (v7x has 2 TensorCores
    # sharded over the "parallel" axis; also enables DMA/compute overlap).
    if b_ceil >= 2 * gran:
        bt = min(bt, max(gran, (b_ceil // 2) // gran * gran))
    # Shrink until the per-step VMEM estimate fits the budget.
    while bt > gran and est_fn(bt) > budget:
        bt -= gran
    return bt


def _make_kernel(kernel_sizes, seq_len, b_tile, f_pad, out_pad, mm_dtype):
    n_ks = len(kernel_sizes)

    def kernel(*refs):
        # refs = [x, conv_w * n_ks, conv_b, wfc, bfc, out]
        x_ref = refs[0]                            # (S, B_TILE, E)     mm_dtype
        conv_w = refs[1:1 + n_ks]                  # each (fs*E, F_PAD) mm_dtype
        cb_ref = refs[1 + n_ks]                    # (n_ks, F_PAD)      f32
        wfc_ref = refs[2 + n_ks]                   # (n_ks*F_PAD, OUT_PAD) mm_dtype
        bfc_ref = refs[3 + n_ks]                   # (1, OUT_PAD)       f32
        o_ref = refs[4 + n_ks]                     # (B_TILE, OUT_PAD)  f32

        x = x_ref[...]                             # stays in mm_dtype for the MXU
        e = x.shape[-1]
        cb = cb_ref[...]                           # (n_ks, F_PAD)

        pooled_feats = []
        for idx, fs in enumerate(kernel_sizes):
            L = seq_len + 1 - fs
            # im2col: window of fs consecutive embeddings -> (L, B_TILE, fs*E).
            win = jnp.concatenate([x[k:k + L] for k in range(fs)], axis=-1)
            # Leading-dim merge is layout-trivial because B_TILE is a multiple
            # of the native sublane tile (8 for f32, 16 for bf16).
            win2 = win.reshape(L * b_tile, fs * e)
            # One MXU matmul per kernel size, f32 accumulation.
            conv = jnp.dot(win2, conv_w[idx][...],
                           preferred_element_type=jnp.float32)
            conv = conv.reshape(L, b_tile, f_pad)
            # Max-pool over time FIRST; bias + ReLU after (exactly commutes:
            # bias is time-invariant, ReLU monotone) -> only (B_TILE, F_PAD)
            # elementwise work instead of (L, B_TILE, F_PAD).
            pooled = jnp.max(conv, axis=0)                       # (B_TILE, F_PAD)
            pooled = jnp.maximum(pooled + cb[idx:idx + 1, :], 0.0)
            pooled_feats.append(pooled.astype(mm_dtype))

        # Lane-aligned concat (F_PAD is a multiple of 128) -> single FC matmul.
        feats = jnp.concatenate(pooled_feats, axis=-1)           # (B_TILE, n_ks*F_PAD)
        logits = jnp.dot(feats, wfc_ref[...],
                         preferred_element_type=jnp.float32)
        logits = logits + bfc_ref[...]             # padded lanes get -1e30 bias

        # LogSoftmax over the (lane) class dim; padded lanes contribute exp(-big)=0.
        m = jnp.max(logits, axis=-1, keepdims=True)
        lse = m + jnp.log(jnp.sum(jnp.exp(logits - m), axis=-1, keepdims=True))
        o_ref[...] = (logits - lse).astype(o_ref.dtype)

    return kernel


@functools.partial(jax.jit, static_argnames=("kernel_sizes", "b_tile", "use_bf16"))
def ibmcnn_forward(x, conv_ws, conv_bs, wfc, bfc, *, kernel_sizes,
                   b_tile=128, use_bf16=True):
    """x: (B, S, E) float32.  Returns log-softmax logits (B, output_dim) in f32."""
    B, S, E = x.shape
    F = conv_ws[0].shape[-1]
    out_dim = wfc.shape[-1]
    n_ks = len(kernel_sizes)

    mm_dtype = jnp.bfloat16 if use_bf16 else jnp.float32
    x_bytes = 2 if use_bf16 else 4
    gran = 16 if use_bf16 else 8                    # native sublane tile per dtype

    f_pad = _round_up(F, LANE)
    out_pad = _round_up(out_dim, LANE)

    budget = _vmem_budget_bytes()
    est_fn = lambda bt: _vmem_estimate(bt, S, E, kernel_sizes, f_pad, out_pad,
                                       x_bytes, x_bytes)
    bt = _choose_b_tile(b_tile, B, gran, est_fn, budget)
    b_pad = _round_up(B, bt)

    # Time-major layout (S, B_pad, E); cast to the matmul dtype BEFORE the
    # transpose/pad so this extra wrapper HBM pass moves half the bytes in
    # bf16 mode.  Padded batch rows are zeros and sliced off at the end.
    # TODO(synk): produce embeddings time-major / bf16 upstream to drop this pass.
    xt = jnp.pad(jnp.transpose(x.astype(mm_dtype), (1, 0, 2)),
                 ((0, 0), (0, b_pad - B), (0, 0)))

    operands = [xt]
    in_specs = [pl.BlockSpec((S, bt, E), lambda i: (0, i, 0))]

    # Conv weights as im2col matrices: (fs, E, F) -> (fs*E, F_PAD), zero-padded filters.
    for w in conv_ws:
        fs = w.shape[0]
        w2 = jnp.pad(w.reshape(fs * E, F).astype(mm_dtype),
                     ((0, 0), (0, f_pad - F)))
        operands.append(w2)
        in_specs.append(pl.BlockSpec((fs * E, f_pad), lambda i: (0, 0)))

    # Conv biases folded into one (n_ks, F_PAD) f32 array (fewer operands/buffers).
    cb = jnp.zeros((n_ks, f_pad), jnp.float32)
    for i, b in enumerate(conv_bs):
        cb = cb.at[i, :F].set(b.reshape(-1).astype(jnp.float32))
    operands.append(cb)
    in_specs.append(pl.BlockSpec((n_ks, f_pad), lambda i: (0, 0)))

    # FC weight as one (n_ks*F_PAD, OUT_PAD) matrix matching the pooled-concat order.
    wfc_pad = jnp.zeros((n_ks * f_pad, out_pad), mm_dtype)
    for i in range(n_ks):
        wfc_pad = wfc_pad.at[i * f_pad:i * f_pad + F, :out_dim].set(
            wfc[i * F:(i + 1) * F, :].astype(mm_dtype))
    operands.append(wfc_pad)
    in_specs.append(pl.BlockSpec((n_ks * f_pad, out_pad), lambda i: (0, 0)))

    # FC bias: padded logit lanes get a huge negative so log-softmax ignores them.
    bfc2 = jnp.pad(bfc.reshape(1, out_dim).astype(jnp.float32),
                   ((0, 0), (0, out_pad - out_dim)), constant_values=NEG_BIG)
    operands.append(bfc2)
    in_specs.append(pl.BlockSpec((1, out_pad), lambda i: (0, 0)))

    kernel = _make_kernel(tuple(kernel_sizes), S, bt, f_pad, out_pad, mm_dtype)

    # Advisory cost estimate so XLA schedules around the custom call.
    flops = 0
    for fs in kernel_sizes:
        flops += 2 * b_pad * (S + 1 - fs) * (fs * E) * f_pad
    flops += 2 * b_pad * (n_ks * f_pad) * out_pad
    bytes_accessed = sum(int(op.size) * op.dtype.itemsize for op in operands)
    bytes_accessed += b_pad * out_pad * 4

    out = pl.pallas_call(
        kernel,
        out_shape=jax.ShapeDtypeStruct((b_pad, out_pad), jnp.float32),
        grid_spec=pltpu.PrefetchScalarGridSpec(
            num_scalar_prefetch=0,
            grid=(b_pad // bt,),
            in_specs=in_specs,
            out_specs=pl.BlockSpec((bt, out_pad), lambda i: (i, 0)),
        ),
        compiler_params=pltpu.CompilerParams(
            dimension_semantics=("parallel",),
            vmem_limit_bytes=budget,
        ),
        cost_estimate=pl.CostEstimate(
            flops=int(flops),
            transcendentals=int(b_pad * out_pad),
            bytes_accessed=int(bytes_accessed)),
    )(*operands)

    return out[:B, :out_dim]


def ibmcnn_reference(x, conv_ws, conv_bs, wfc, bfc, kernel_sizes,
                     mm_dtype=jnp.float32, precision=None):
    """Pure-JAX reference of the PyTorch forward pass (eval mode).

    mm_dtype / precision control the matmul operand dtype and XLA precision so
    the reference can mirror either the exact-f32 math or the kernel's bf16
    quantization (f32 accumulation either way).
    """
    B, S, E = x.shape
    xc = x.astype(mm_dtype)
    pooled = []
    for (w, b, fs) in zip(conv_ws, conv_bs, kernel_sizes):
        L = S + 1 - fs
        acc = jnp.zeros((B, L, w.shape[-1]), jnp.float32)
        for k in range(fs):
            acc = acc + jnp.einsum(
                "bse,ef->bsf", xc[:, k:k + L, :], w[k].astype(mm_dtype),
                preferred_element_type=jnp.float32, precision=precision)
        acc = jax.nn.relu(acc + b[None].astype(jnp.float32))
        pooled.append(jnp.max(acc, axis=1))
    cat = jnp.concatenate(pooled, axis=1)
    logits = jnp.dot(cat.astype(mm_dtype), wfc.astype(mm_dtype),
                     preferred_element_type=jnp.float32, precision=precision)
    logits = logits + bfc.astype(jnp.float32)
    return jax.nn.log_softmax(logits, axis=1)


if __name__ == "__main__":
    # Small, module-consistent shapes.  batch=32 -> auto b_tile=16 -> grid of 2
    # steps (both v7x TensorCores get work) while staying tiny.
    batch = 32
    max_sen_len = 16
    embedding_dim = 32
    kernel_sizes = (2, 3, 4)
    num_filters = 16
    output_dim = 8

    key = jax.random.PRNGKey(0)
    keys = jax.random.split(key, 1 + 2 * len(kernel_sizes) + 2)

    # Input: pre-embedded sentence batch (B, S, E), as the forward pass expects.
    x = jax.random.normal(keys[0], (batch, max_sen_len, embedding_dim), jnp.float32)

    # Deterministic parameter init (shapes match nn.Conv2d(1, F, (fs, E)) / nn.Linear).
    conv_ws, conv_bs = [], []
    for i, fs in enumerate(kernel_sizes):
        kw = keys[1 + 2 * i]
        kb = keys[2 + 2 * i]
        fan_in = fs * embedding_dim
        bound = 1.0 / (fan_in ** 0.5)
        # PyTorch conv weight is (F, 1, fs, E); stored as (fs, E, F) for matmul.
        conv_ws.append(
            jax.random.uniform(kw, (fs, embedding_dim, num_filters),
                               jnp.float32, -bound, bound))
        conv_bs.append(
            jax.random.uniform(kb, (1, num_filters), jnp.float32, -bound, bound))

    fc_in = len(kernel_sizes) * num_filters
    bound = 1.0 / (fc_in ** 0.5)
    # PyTorch linear weight is (output_dim, fc_in); stored transposed as (fc_in, output_dim).
    wfc = jax.random.uniform(keys[-2], (fc_in, output_dim), jnp.float32, -bound, bound)
    bfc = jax.random.uniform(keys[-1], (1, output_dim), jnp.float32, -bound, bound)

    # References: exact-f32 ground truth and a bf16-quantized mirror of the kernel.
    ref_exact = ibmcnn_reference(x, conv_ws, conv_bs, wfc, bfc, kernel_sizes,
                                 mm_dtype=jnp.float32,
                                 precision=jax.lax.Precision.HIGHEST)
    ref_bf16 = ibmcnn_reference(x, conv_ws, conv_bs, wfc, bfc, kernel_sizes,
                                mm_dtype=jnp.bfloat16)

    # Default path: bf16 MXU operands with f32 accumulation.
    out = ibmcnn_forward(x, tuple(conv_ws), tuple(conv_bs), wfc, bfc,
                         kernel_sizes=kernel_sizes)
    out = jax.block_until_ready(out)

    assert out.shape == (batch, output_dim)
    assert bool(jnp.all(jnp.isfinite(out)))
    # Structural check: same bf16-quantized math as the kernel -> tight tolerance.
    assert jnp.allclose(out, ref_bf16, atol=5e-3, rtol=5e-3), "mismatch vs bf16 reference"
    # Numeric-quality sanity check vs the exact-f32 reference.
    assert jnp.allclose(out, ref_exact, atol=1e-1, rtol=1e-1), "mismatch vs f32 reference"

    print("KERNEL_OK")
</pallas_src>

<mosaic_0001>
module attributes {stable_mosaic.version = 11 : i64} {
  func.func @kernel(%arg0: i32, %arg1: memref<16x16x32xbf16, #tpu.memory_space<vmem>>, %arg2: memref<64x128xbf16, #tpu.memory_space<vmem>>, %arg3: memref<96x128xbf16, #tpu.memory_space<vmem>>, %arg4: memref<128x128xbf16, #tpu.memory_space<vmem>>, %arg5: memref<3x128xf32, #tpu.memory_space<vmem>>, %arg6: memref<384x128xbf16, #tpu.memory_space<vmem>>, %arg7: memref<1x128xf32, #tpu.memory_space<vmem>>, %arg8: memref<16x128xf32, #tpu.memory_space<vmem>>) attributes {dimension_semantics = [#tpu.dimension_semantics<parallel>], iteration_bounds = array<i64: 2>, scalar_prefetch = 0 : i64, scratch_operands = 0 : i64, tpu.core_type = #tpu.core_type<tc>, window_params = [{transform_indices = @transform_0, window_bounds = array<i64: 16, 16, 32>}, {pipeline_mode = #tpu.pipeline_mode<synchronous>, transform_indices = @transform_1, window_bounds = array<i64: 64, 128>}, {pipeline_mode = #tpu.pipeline_mode<synchronous>, transform_indices = @transform_2, window_bounds = array<i64: 96, 128>}, {pipeline_mode = #tpu.pipeline_mode<synchronous>, transform_indices = @transform_3, window_bounds = array<i64: 128, 128>}, {pipeline_mode = #tpu.pipeline_mode<synchronous>, transform_indices = @transform_4, window_bounds = array<i64: 3, 128>}, {pipeline_mode = #tpu.pipeline_mode<synchronous>, transform_indices = @transform_5, window_bounds = array<i64: 384, 128>}, {pipeline_mode = #tpu.pipeline_mode<synchronous>, transform_indices = @transform_6, window_bounds = array<i64: 1, 128>}, {transform_indices = @transform_7, window_bounds = array<i64: 16, 128>}]} {
    %c0 = arith.constant 0 : index
    %c0_0 = arith.constant 0 : index
    %c0_1 = arith.constant 0 : index
    %0 = vector.load %arg1[%c0, %c0_0, %c0_1] : memref<16x16x32xbf16, #tpu.memory_space<vmem>>, vector<16x16x32xbf16>
    %c0_2 = arith.constant 0 : index
    %c0_3 = arith.constant 0 : index
    %1 = vector.load %arg5[%c0_2, %c0_3] : memref<3x128xf32, #tpu.memory_space<vmem>>, vector<3x128xf32>
    %2 = vector.extract_strided_slice %0 {offsets = [0, 0, 0], sizes = [15, 16, 32], strides = [1, 1, 1]} : vector<16x16x32xbf16> to vector<15x16x32xbf16>
    %3 = vector.extract_strided_slice %0 {offsets = [1, 0, 0], sizes = [15, 16, 32], strides = [1, 1, 1]} : vector<16x16x32xbf16> to vector<15x16x32xbf16>
    %4 = tpu.concatenate %2, %3 in 2 : vector<15x16x32xbf16>, vector<15x16x32xbf16> -> vector<15x16x64xbf16>
    %5 = vector.shape_cast %4 : vector<15x16x64xbf16> to vector<240x64xbf16>
    %c0_4 = arith.constant 0 : index
    %c0_5 = arith.constant 0 : index
    %6 = vector.load %arg2[%c0_4, %c0_5] : memref<64x128xbf16, #tpu.memory_space<vmem>>, vector<64x128xbf16>
    %cst = arith.constant dense<0.000000e+00> : vector<240x128xf32>
    %7 = tpu.matmul %5, %6, %cst {dimension_numbers = #tpu.dot_dimension_numbers<[1], [0], [0], [1], [0, 0, 1, 1], [], []>} : vector<240x64xbf16>, vector<64x128xbf16>, vector<240x128xf32> -> vector<240x128xf32>
    %8 = vector.shape_cast %7 : vector<240x128xf32> to vector<15x16x128xf32>
    %cst_6 = arith.constant dense<0xFF800000> : vector<16x128xf32>
    %9 = vector.multi_reduction <maximumf>, %8, %cst_6 [0] : vector<15x16x128xf32> to vector<16x128xf32>
    %10 = vector.extract_strided_slice %1 {offsets = [0, 0], sizes = [1, 128], strides = [1, 1]} : vector<3x128xf32> to vector<1x128xf32>
    %11 = vector.broadcast %10 : vector<1x128xf32> to vector<16x128xf32>
    %12 = arith.addf %9, %11 : vector<16x128xf32>
    %cst_7 = arith.constant 0.000000e+00 : f32
    %13 = vector.broadcast %cst_7 : f32 to vector<16x128xf32>
    %14 = arith.maximumf %12, %13 : vector<16x128xf32>
    %15 = arith.truncf %14 : vector<16x128xf32> to vector<16x128xbf16>
    %16 = vector.extract_strided_slice %0 {offsets = [0, 0, 0], sizes = [14, 16, 32], strides = [1, 1, 1]} : vector<16x16x32xbf16> to vector<14x16x32xbf16>
    %17 = vector.extract_strided_slice %0 {offsets = [1, 0, 0], sizes = [14, 16, 32], strides = [1, 1, 1]} : vector<16x16x32xbf16> to vector<14x16x32xbf16>
    %18 = vector.extract_strided_slice %0 {offsets = [2, 0, 0], sizes = [14, 16, 32], strides = [1, 1, 1]} : vector<16x16x32xbf16> to vector<14x16x32xbf16>
    %19 = tpu.concatenate %16, %17, %18 in 2 : vector<14x16x32xbf16>, vector<14x16x32xbf16>, vector<14x16x32xbf16> -> vector<14x16x96xbf16>
    %20 = vector.shape_cast %19 : vector<14x16x96xbf16> to vector<224x96xbf16>
    %c0_8 = arith.constant 0 : index
    %c0_9 = arith.constant 0 : index
    %21 = vector.load %arg3[%c0_8, %c0_9] : memref<96x128xbf16, #tpu.memory_space<vmem>>, vector<96x128xbf16>
    %cst_10 = arith.constant dense<0.000000e+00> : vector<224x128xf32>
    %22 = tpu.matmul %20, %21, %cst_10 {dimension_numbers = #tpu.dot_dimension_numbers<[1], [0], [0], [1], [0, 0, 1, 1], [], []>} : vector<224x96xbf16>, vector<96x128xbf16>, vector<224x128xf32> -> vector<224x128xf32>
    %23 = vector.shape_cast %22 : vector<224x128xf32> to vector<14x16x128xf32>
    %cst_11 = arith.constant dense<0xFF800000> : vector<16x128xf32>
    %24 = vector.multi_reduction <maximumf>, %23, %cst_11 [0] : vector<14x16x128xf32> to vector<16x128xf32>
    %25 = vector.extract_strided_slice %1 {offsets = [1, 0], sizes = [1, 128], strides = [1, 1]} : vector<3x128xf32> to vector<1x128xf32>
    %26 = vector.broadcast %25 : vector<1x128xf32> to vector<16x128xf32>
    %27 = arith.addf %24, %26 : vector<16x128xf32>
    %cst_12 = arith.constant 0.000000e+00 : f32
    %28 = vector.broadcast %cst_12 : f32 to vector<16x128xf32>
    %29 = arith.maximumf %27, %28 : vector<16x128xf32>
    %30 = arith.truncf %29 : vector<16x128xf32> to vector<16x128xbf16>
    %31 = vector.extract_strided_slice %0 {offsets = [0, 0, 0], sizes = [13, 16, 32], strides = [1, 1, 1]} : vector<16x16x32xbf16> to vector<13x16x32xbf16>
    %32 = vector.extract_strided_slice %0 {offsets = [1, 0, 0], sizes = [13, 16, 32], strides = [1, 1, 1]} : vector<16x16x32xbf16> to vector<13x16x32xbf16>
    %33 = vector.extract_strided_slice %0 {offsets = [2, 0, 0], sizes = [13, 16, 32], strides = [1, 1, 1]} : vector<16x16x32xbf16> to vector<13x16x32xbf16>
    %34 = vector.extract_strided_slice %0 {offsets = [3, 0, 0], sizes = [13, 16, 32], strides = [1, 1, 1]} : vector<16x16x32xbf16> to vector<13x16x32xbf16>
    %35 = tpu.concatenate %31, %32, %33, %34 in 2 : vector<13x16x32xbf16>, vector<13x16x32xbf16>, vector<13x16x32xbf16>, vector<13x16x32xbf16> -> vector<13x16x128xbf16>
    %36 = vector.shape_cast %35 : vector<13x16x128xbf16> to vector<208x128xbf16>
    %c0_13 = arith.constant 0 : index
    %c0_14 = arith.constant 0 : index
    %37 = vector.load %arg4[%c0_13, %c0_14] : memref<128x128xbf16, #tpu.memory_space<vmem>>, vector<128x128xbf16>
    %cst_15 = arith.constant dense<0.000000e+00> : vector<208x128xf32>
    %38 = tpu.matmul %36, %37, %cst_15 {dimension_numbers = #tpu.dot_dimension_numbers<[1], [0], [0], [1], [0, 0, 1, 1], [], []>} : vector<208x128xbf16>, vector<128x128xbf16>, vector<208x128xf32> -> vector<208x128xf32>
    %39 = vector.shape_cast %38 : vector<208x128xf32> to vector<13x16x128xf32>
    %cst_16 = arith.constant dense<0xFF800000> : vector<16x128xf32>
    %40 = vector.multi_reduction <maximumf>, %39, %cst_16 [0] : vector<13x16x128xf32> to vector<16x128xf32>
    %41 = vector.extract_strided_slice %1 {offsets = [2, 0], sizes = [1, 128], strides = [1, 1]} : vector<3x128xf32> to vector<1x128xf32>
    %42 = vector.broadcast %41 : vector<1x128xf32> to vector<16x128xf32>
    %43 = arith.addf %40, %42 : vector<16x128xf32>
    %cst_17 = arith.constant 0.000000e+00 : f32
    %44 = vector.broadcast %cst_17 : f32 to vector<16x128xf32>
    %45 = arith.maximumf %43, %44 : vector<16x128xf32>
    %46 = arith.truncf %45 : vector<16x128xf32> to vector<16x128xbf16>
    %47 = tpu.concatenate %15, %30, %46 in 1 : vector<16x128xbf16>, vector<16x128xbf16>, vector<16x128xbf16> -> vector<16x384xbf16>
    %c0_18 = arith.constant 0 : index
    %c0_19 = arith.constant 0 : index
    %48 = vector.load %arg6[%c0_18, %c0_19] : memref<384x128xbf16, #tpu.memory_space<vmem>>, vector<384x128xbf16>
    %cst_20 = arith.constant dense<0.000000e+00> : vector<16x128xf32>
    %49 = tpu.matmul %47, %48, %cst_20 {dimension_numbers = #tpu.dot_dimension_numbers<[1], [0], [0], [1], [0, 0, 1, 1], [], []>} : vector<16x384xbf16>, vector<384x128xbf16>, vector<16x128xf32> -> vector<16x128xf32>
    %c0_21 = arith.constant 0 : index
    %c0_22 = arith.constant 0 : index
    %50 = vector.load %arg7[%c0_21, %c0_22] : memref<1x128xf32, #tpu.memory_space<vmem>>, vector<1x128xf32>
    %51 = vector.broadcast %50 : vector<1x128xf32> to vector<16x128xf32>
    %52 = arith.addf %49, %51 : vector<16x128xf32>
    %cst_23 = arith.constant dense<0xFF800000> : vector<16xf32>
    %53 = vector.multi_reduction <maximumf>, %52, %cst_23 [1] : vector<16x128xf32> to vector<16xf32>
    %54 = vector.shape_cast %53 : vector<16xf32> to vector<16x1xf32>
    %55 = vector.broadcast %54 : vector<16x1xf32> to vector<16x128xf32>
    %56 = arith.subf %52, %55 : vector<16x128xf32>
    %57 = math.exp %56 : vector<16x128xf32>
    %cst_24 = arith.constant dense<0.000000e+00> : vector<16xf32>
    %58 = vector.multi_reduction <add>, %57, %cst_24 [1] : vector<16x128xf32> to vector<16xf32>
    %59 = vector.shape_cast %58 : vector<16xf32> to vector<16x1xf32>
    %60 = math.log %59 : vector<16x1xf32>
    %61 = arith.addf %54, %60 : vector<16x1xf32>
    %62 = vector.broadcast %61 : vector<16x1xf32> to vector<16x128xf32>
    %63 = arith.subf %52, %62 : vector<16x128xf32>
    %c0_25 = arith.constant 0 : index
    %c0_26 = arith.constant 0 : index
    %64 = vector.load %arg8[%c0_25, %c0_26] : memref<16x128xf32, #tpu.memory_space<vmem>>, vector<16x128xf32>
    tpu.vector_store %arg8[%c0_25, %c0_26], %63 {strides = array<i32>} : memref<16x128xf32, #tpu.memory_space<vmem>>, vector<16x128xf32>,
    return
  }
  func.func @transform_0(%arg0: i32) -> (i32, i32, i32) {
    %c0_i32 = arith.constant 0 : i32
    %c0_i32_0 = arith.constant 0 : i32
    %c0_i32_1 = arith.constant 0 : i32
    return %c0_i32, %arg0, %c0_i32_0 : i32, i32, i32
  }
  func.func @transform_1(%arg0: i32) -> (i32, i32) {
    %c0_i32 = arith.constant 0 : i32
    %c0_i32_0 = arith.constant 0 : i32
    %c0_i32_1 = arith.constant 0 : i32
    return %c0_i32, %c0_i32_0 : i32, i32
  }
  func.func @transform_2(%arg0: i32) -> (i32, i32) {
    %c0_i32 = arith.constant 0 : i32
    %c0_i32_0 = arith.constant 0 : i32
    %c0_i32_1 = arith.constant 0 : i32
    return %c0_i32, %c0_i32_0 : i32, i32
  }
  func.func @transform_3(%arg0: i32) -> (i32, i32) {
    %c0_i32 = arith.constant 0 : i32
    %c0_i32_0 = arith.constant 0 : i32
    %c0_i32_1 = arith.constant 0 : i32
    return %c0_i32, %c0_i32_0 : i32, i32
  }
  func.func @transform_4(%arg0: i32) -> (i32, i32) {
    %c0_i32 = arith.constant 0 : i32
    %c0_i32_0 = arith.constant 0 : i32
    %c0_i32_1 = arith.constant 0 : i32
    return %c0_i32, %c0_i32_0 : i32, i32
  }
  func.func @transform_5(%arg0: i32) -> (i32, i32) {
    %c0_i32 = arith.constant 0 : i32
    %c0_i32_0 = arith.constant 0 : i32
    %c0_i32_1 = arith.constant 0 : i32
    return %c0_i32, %c0_i32_0 : i32, i32
  }
  func.func @transform_6(%arg0: i32) -> (i32, i32) {
    %c0_i32 = arith.constant 0 : i32
    %c0_i32_0 = arith.constant 0 : i32
    %c0_i32_1 = arith.constant 0 : i32
    return %c0_i32, %c0_i32_0 : i32, i32
  }
  func.func @transform_7(%arg0: i32) -> (i32, i32) {
    %c0_i32 = arith.constant 0 : i32
    %c0_i32_0 = arith.constant 0 : i32
    return %arg0, %c0_i32 : i32, i32
  }
}

</mosaic_0001>

<llo_original>
// kernel: ibmcnn_forward.1
$region0: #{ibmcnn_forward.1}
  #allocation0 [shape = 'u32[]', space=smem, size = 0x4, offset = 0x4, fixed_abs, tag = 'smem constant byte address 0x4 - core index']
  #allocation1 [shape = 'u32[144,128]{1,0:T(1,128)}', space=vmem, size = 0x12000, scoped, tag = 'internal scratch']
  %s0 = inlined_call_operand.vmem [shape: bf16[16,32,32], index: 0, kind: input, shape index: {}]
  %s1 = inlined_call_operand.vmem [shape: bf16[64,128], index: 1, kind: input, shape index: {}]
  %s2 = inlined_call_operand.vmem [shape: bf16[96,128], index: 2, kind: input, shape index: {}]
  %s3 = inlined_call_operand.vmem [shape: bf16[128,128], index: 3, kind: input, shape index: {}]
  %s4 = inlined_call_operand.vmem [shape: f32[3,128], index: 4, kind: input, shape index: {}]
  %s5 = inlined_call_operand.vmem [shape: bf16[384,128], index: 5, kind: input, shape index: {}]
  %s6 = inlined_call_operand.vmem [shape: f32[1,128], index: 6, kind: input, shape index: {}]
  %s7 = inlined_call_operand.vmem [shape: f32[32,128], index: 7, kind: output, shape index: {}]
  %s8 = sld [smem:[#allocation0]]
  $region102: #{ibmcnn_forward.1} parent=0
    _
  %s10 = ssub.s32 1, %s8
  %s11 = scalar_select 0, %s10, %s8
  $region1: #{ibmcnn_forward.1} parent=0
    #allocation2 [shape = 'u8[131072]{0}', space=vmem, size = 0x20000, scoped, tag = 'input window, operand 0']
    loop: start=0, step=1, limit=4
    $region2: #{ibmcnn_forward.1} parent=1 // loop_pre_header
      _
    $region3: #{ibmcnn_forward.1} parent=1 // loop_header
      %s13 = sphi 0, %s17
      %p14 = scmp.ge.s32.totalorder %s13, 4
      %s23 = sphi 0, %s25
      %s26 = sphi 0, %s23
      %s27 = sphi 0, %s26
      %s43 = sphi 0, %s27
      %s47 = sphi 0, %s47
      %s49 = sphi 0, %s47
      %s50 = sphi 0, %s49
      %s64 = sphi 0, %s50
      %s68 = sphi 0, %s68
      %s70 = sphi 0, %s68
      %s71 = sphi 0, %s70
      %s85 = sphi 0, %s71
      %s89 = sphi 0, %s89
      %s91 = sphi 0, %s89
      %s92 = sphi 0, %s91
      %s106 = sphi 0, %s92
      %s110 = sphi 0, %s110
      %s112 = sphi 0, %s110
      %s113 = sphi 0, %s112
      %s127 = sphi 0, %s113
      %s131 = sphi 0, %s131
      %s133 = sphi 0, %s131
      %s134 = sphi 0, %s133
      %s148 = sphi 0, %s134
      %s152 = sphi 0, %s152
      %s154 = sphi 0, %s152
      %s155 = sphi 0, %s154
      %s169 = sphi 0, %s155
      %s175 = sphi 0, %s177
      %s178 = sphi 0, %s175
      %s179 = sphi 0, %s178
      %s195 = sphi 0, %s179
    $region4: #{ibmcnn_forward.1} parent=1 // loop_header_branch
      %16 = sbr.rel (%p14) target = $region8
    $region5: #{ibmcnn_forward.1} parent=1 // loop_body
      %s18 = ssub.s32 %s13, 1
      %s19 = ssub.s32 %s13, 2
      %s20 = sadd.s32 %s13, 1
      %s21 = ssub.s32 %s13, %s20
      %p22 = scmp.eq.s32.totalorder %s21, 0
      %s24 = sadd.s32 %s23, 1
      %s25 = scalar_select %p22, %s23, %s24
      %p28 = pneg %p22
      %p29 = scmp.eq.s32.totalorder %s13, 1
      %p30 = por %p28, %p29
      %p31 = scmp.ne.s32.totalorder %s23, %s26
      %p32 = scmp.eq.s32.totalorder %s13, 0
      %p33 = por %p31, %p32
      %p34 = scmp.ne.s32.totalorder %s23, %s26
      %p35 = scmp.eq.s32.totalorder %s18, 1
      %p36 = por %p34, %p35
      %p37 = scmp.ne.s32.totalorder %s26, %s27
      %p38 = scmp.eq.s32.totalorder %s18, 0
      %p39 = por %p37, %p38
      %p40 = scmp.ne.s32.totalorder %s26, %s27
      %p41 = scmp.eq.s32.totalorder %s19, 1
      %p42 = por %p40, %p41
      %p44 = scmp.ne.s32.totalorder %s27, %s43
      %p45 = scmp.eq.s32.totalorder %s19, 0
      %p46 = por %p44, %p45
      %s48 = sadd.s32 %s47, 1
      %p51 = scmp.eq.s32.totalorder %s13, 1
      %p52 = scmp.ne.s32.totalorder %s47, %s49
      %p53 = scmp.eq.s32.totalorder %s13, 0
      %p54 = por %p52, %p53
      %p55 = scmp.ne.s32.totalorder %s47, %s49
      %p56 = scmp.eq.s32.totalorder %s18, 1
      %p57 = por %p55, %p56
      %p58 = scmp.ne.s32.totalorder %s49, %s50
      %p59 = scmp.eq.s32.totalorder %s18, 0
      %p60 = por %p58, %p59
      %p61 = scmp.ne.s32.totalorder %s49, %s50
      %p62 = scmp.eq.s32.totalorder %s19, 1
      %p63 = por %p61, %p62
      %p65 = scmp.ne.s32.totalorder %s50, %s64
      %p66 = scmp.eq.s32.totalorder %s19, 0
      %p67 = por %p65, %p66
      %s69 = sadd.s32 %s68, 1
      %p72 = scmp.eq.s32.totalorder %s13, 1
      %p73 = scmp.ne.s32.totalorder %s68, %s70
      %p74 = scmp.eq.s32.totalorder %s13, 0
      %p75 = por %p73, %p74
      %p76 = scmp.ne.s32.totalorder %s68, %s70
      %p77 = scmp.eq.s32.totalorder %s18, 1
      %p78 = por %p76, %p77
      %p79 = scmp.ne.s32.totalorder %s70, %s71
      %p80 = scmp.eq.s32.totalorder %s18, 0
      %p81 = por %p79, %p80
      %p82 = scmp.ne.s32.totalorder %s70, %s71
      %p83 = scmp.eq.s32.totalorder %s19, 1
      %p84 = por %p82, %p83
      %p86 = scmp.ne.s32.totalorder %s71, %s85
      %p87 = scmp.eq.s32.totalorder %s19, 0
      %p88 = por %p86, %p87
      %s90 = sadd.s32 %s89, 1
      %p93 = scmp.eq.s32.totalorder %s13, 1
      %p94 = scmp.ne.s32.totalorder %s89, %s91
      %p95 = scmp.eq.s32.totalorder %s13, 0
      %p96 = por %p94, %p95
      %p97 = scmp.ne.s32.totalorder %s89, %s91
      %p98 = scmp.eq.s32.totalorder %s18, 1
      %p99 = por %p97, %p98
      %p100 = scmp.ne.s32.totalorder %s91, %s92
      %p101 = scmp.eq.s32.totalorder %s18, 0
      %p102 = por %p100, %p101
      %p103 = scmp.ne.s32.totalorder %s91, %s92
      %p104 = scmp.eq.s32.totalorder %s19, 1
      %p105 = por %p103, %p104
      %p107 = scmp.ne.s32.totalorder %s92, %s106
      %p108 = scmp.eq.s32.totalorder %s19, 0
      %p109 = por %p107, %p108
      %s111 = sadd.s32 %s110, 1
      %p114 = scmp.eq.s32.totalorder %s13, 1
      %p115 = scmp.ne.s32.totalorder %s110, %s112
      %p116 = scmp.eq.s32.totalorder %s13, 0
      %p117 = por %p115, %p116
      %p118 = scmp.ne.s32.totalorder %s110, %s112
      %p119 = scmp.eq.s32.totalorder %s18, 1
      %p120 = por %p118, %p119
      %p121 = scmp.ne.s32.totalorder %s112, %s113
      %p122 = scmp.eq.s32.totalorder %s18, 0
      %p123 = por %p121, %p122
      %p124 = scmp.ne.s32.totalorder %s112, %s113
      %p125 = scmp.eq.s32.totalorder %s19, 1
      %p126 = por %p124, %p125
      %p128 = scmp.ne.s32.totalorder %s113, %s127
      %p129 = scmp.eq.s32.totalorder %s19, 0
      %p130 = por %p128, %p129
      %s132 = sadd.s32 %s131, 1
      %p135 = scmp.eq.s32.totalorder %s13, 1
      %p136 = scmp.ne.s32.totalorder %s131, %s133
      %p137 = scmp.eq.s32.totalorder %s13, 0
      %p138 = por %p136, %p137
      %p139 = scmp.ne.s32.totalorder %s131, %s133
      %p140 = scmp.eq.s32.totalorder %s18, 1
      %p141 = por %p139, %p140
      %p142 = scmp.ne.s32.totalorder %s133, %s134
      %p143 = scmp.eq.s32.totalorder %s18, 0
      %p144 = por %p142, %p143
      %p145 = scmp.ne.s32.totalorder %s133, %s134
      %p146 = scmp.eq.s32.totalorder %s19, 1
      %p147 = por %p145, %p146
      %p149 = scmp.ne.s32.totalorder %s134, %s148
      %p150 = scmp.eq.s32.totalorder %s19, 0
      %p151 = por %p149, %p150
      %s153 = sadd.s32 %s152, 1
      %p156 = scmp.eq.s32.totalorder %s13, 1
      %p157 = scmp.ne.s32.totalorder %s152, %s154
      %p158 = scmp.eq.s32.totalorder %s13, 0
      %p159 = por %p157, %p158
      %p160 = scmp.ne.s32.totalorder %s152, %s154
      %p161 = scmp.eq.s32.totalorder %s18, 1
      %p162 = por %p160, %p161
      %p163 = scmp.ne.s32.totalorder %s154, %s155
      %p164 = scmp.eq.s32.totalorder %s18, 0
      %p165 = por %p163, %p164
      %p166 = scmp.ne.s32.totalorder %s154, %s155
      %p167 = scmp.eq.s32.totalorder %s19, 1
      %p168 = por %p166, %p167
      %p170 = scmp.ne.s32.totalorder %s155, %s169
      %p171 = scmp.eq.s32.totalorder %s19, 0
      %p172 = por %p170, %p171
      %s173 = ssub.s32 %s13, %s20
      %p174 = scmp.eq.s32.totalorder %s173, 0
      %s176 = sadd.s32 %s175, 1
      %s177 = scalar_select %p174, %s175, %s176
      %p180 = pneg %p174
      %p181 = scmp.eq.s32.totalorder %s13, 1
      %p182 = por %p180, %p181
      %p183 = scmp.ne.s32.totalorder %s175, %s178
      %p184 = scmp.eq.s32.totalorder %s13, 0
      %p185 = por %p183, %p184
      %p186 = scmp.ne.s32.totalorder %s175, %s178
      %p187 = scmp.eq.s32.totalorder %s18, 1
      %p188 = por %p186, %p187
      %p189 = scmp.ne.s32.totalorder %s178, %s179
      %p190 = scmp.eq.s32.totalorder %s18, 0
      %p191 = por %p189, %p190
      %p192 = scmp.ne.s32.totalorder %s178, %s179
      %p193 = scmp.eq.s32.totalorder %s19, 1
      %p194 = por %p192, %p193
      %p196 = scmp.ne.s32.totalorder %s179, %s195
      %p197 = scmp.eq.s32.totalorder %s19, 0
      %p198 = por %p196, %p197
      %p199 = scmp.le.s32.totalorder 1, %s13
      %p200 = scmp.lt.s32.totalorder %s13, 3
      %p201 = pnand %p199, %p200
      %p202 = pneg %p201
      // Predicated region
      $region9: #{ibmcnn_forward.1} parent=5 // pred_check
        _
      $region10: #{ibmcnn_forward.1} parent=5 // pred_check_branch
        %204 = sbr.rel (%p201) target = $region12
      $region11: #{ibmcnn_forward.1} parent=5 // pred_region
        %s205 = ssub.s32 %s13, 1
        // Predicated region
        $region13: #{ibmcnn_forward.1} parent=11 // pred_check
          %p206 = pneg %p60
        $region14: #{ibmcnn_forward.1} parent=11 // pred_check_branch
          %208 = sbr.rel (%p206) target = $region16
        $region15: #{ibmcnn_forward.1} parent=11 // pred_region
          _
        $region16: #{ibmcnn_forward.1} parent=11 // pred_fallthru
          _
        // Predicated region
        $region17: #{ibmcnn_forward.1} parent=11 // pred_check
          %p209 = pneg %p81
        $region18: #{ibmcnn_forward.1} parent=11 // pred_check_branch
          %211 = sbr.rel (%p209) target = $region20
        $region19: #{ibmcnn_forward.1} parent=11 // pred_region
          _
        $region20: #{ibmcnn_forward.1} parent=11 // pred_fallthru
          _
        // Predicated region
        $region21: #{ibmcnn_forward.1} parent=11 // pred_check
          %p212 = pneg %p102
        $region22: #{ibmcnn_forward.1} parent=11 // pred_check_branch
          %214 = sbr.rel (%p212) target = $region24
        $region23: #{ibmcnn_forward.1} parent=11 // pred_region
          _
        $region24: #{ibmcnn_forward.1} parent=11 // pred_fallthru
          _
        // Predicated region
        $region25: #{ibmcnn_forward.1} parent=11 // pred_check
          %p215 = pneg %p123
        $region26: #{ibmcnn_forward.1} parent=11 // pred_check_branch
          %217 = sbr.rel (%p215) target = $region28
        $region27: #{ibmcnn_forward.1} parent=11 // pred_region
          _
        $region28: #{ibmcnn_forward.1} parent=11 // pred_fallthru
          _
        // Predicated region
        $region29: #{ibmcnn_forward.1} parent=11 // pred_check
          %p218 = pneg %p144
        $region30: #{ibmcnn_forward.1} parent=11 // pred_check_branch
          %220 = sbr.rel (%p218) target = $region32
        $region31: #{ibmcnn_forward.1} parent=11 // pred_region
          _
        $region32: #{ibmcnn_forward.1} parent=11 // pred_fallthru
          _
        // Predicated region
        $region33: #{ibmcnn_forward.1} parent=11 // pred_check
          %p221 = pneg %p165
        $region34: #{ibmcnn_forward.1} parent=11 // pred_check_branch
          %223 = sbr.rel (%p221) target = $region36
        $region35: #{ibmcnn_forward.1} parent=11 // pred_region
          _
        $region36: #{ibmcnn_forward.1} parent=11 // pred_fallthru
          _
      $region12: #{ibmcnn_forward.1} parent=5 // pred_fallthru
        _
      %p224 = scmp.lt.s32.totalorder %s13, 2
      // Predicated region
      $region37: #{ibmcnn_forward.1} parent=5 // pred_check
        %p225 = pneg %p224
      $region38: #{ibmcnn_forward.1} parent=5 // pred_check_branch
        %227 = sbr.rel (%p225) target = $region40
      $region39: #{ibmcnn_forward.1} parent=5 // pred_region
        // Predicated region
        $region41: #{ibmcnn_forward.1} parent=39 // pred_check
          %p228 = pneg %p33
        $region42: #{ibmcnn_forward.1} parent=39 // pred_check_branch
          %230 = sbr.rel (%p228) target = $region44
        $region43: #{ibmcnn_forward.1} parent=39 // pred_region
          %s231 = sand.u32 %s23, 1
          %s232 = sand.u32 %s23, 1
          %s233 = smul.addr %s232, 128
          %s234 = scalar_lea.vmem [#allocation2], %s233
          %s235 = smul.u32 2, %s13
          %s236 = smul.addr %s235, 4
          %s237 = scalar_lea.vmem %s0, %s236
          // Predicated region
          $region45: #{ibmcnn_forward.1} parent=43 // pred_check
            _
          $region46: #{ibmcnn_forward.1} parent=43 // pred_check_branch
            %239 = sbr.rel (0) target = $region48
          $region47: #{ibmcnn_forward.1} parent=43 // pred_region
            // Predicated region
            $region49: #{ibmcnn_forward.1} parent=47 // pred_check
              _
            $region50: #{ibmcnn_forward.1} parent=47 // pred_check_branch
              %241 = sbr.rel target = $region52
            $region51: #{ibmcnn_forward.1} parent=47 // pred_region
              // Predicated region
              $region64: #{ibmcnn_forward.1} parent=51 // pred_check
                _
              $region65: #{ibmcnn_forward.1} parent=51 // pred_check_branch
                %318 = sbr.rel (0) target = $region67
              $region66: #{ibmcnn_forward.1} parent=51 // pred_region
                loop: start=0, step=1, limit=1
                $region68: #{ibmcnn_forward.1} parent=66 // loop_pre_header
                  _
                $region69: #{ibmcnn_forward.1} parent=66 // loop_header
                  %s320 = sphi 0, %s324
                  %p321 = scmp.ge.s32.totalorder %s320, 1
                  %s325 = sphi %s237, %s237
                  %s326 = sphi %s234, %s234
                $region70: #{ibmcnn_forward.1} parent=66 // loop_header_branch
                  %323 = sbr.rel (%p321) target = $region74
                $region71: #{ibmcnn_forward.1} parent=66 // loop_body
                  _
                $region72: #{ibmcnn_forward.1} parent=66 // loop_footer
                  %s324 = sadd.s32 1, %s320
                $region73: #{ibmcnn_forward.1} parent=66 // loop_footer_branch
                  %319 = sbr.rel target = $region69
                $region74: #{ibmcnn_forward.1} parent=66 // loop_exit
                  _
                loop: start=0, step=1, limit=1
                $region75: #{ibmcnn_forward.1} parent=66 // loop_pre_header
                  _
                $region76: #{ibmcnn_forward.1} parent=66 // loop_header
                  %s329 = sphi 0, %s333
                  %p330 = scmp.ge.s32.totalorder %s329, 1
                  %s334 = sphi %s237, %s237
                  %s335 = sphi %s234, %s234
                $region77: #{ibmcnn_forward.1} parent=66 // loop_header_branch
                  %332 = sbr.rel (%p330) target = $region81
                $region78: #{ibmcnn_forward.1} parent=66 // loop_body
                  %v336 = vld [vmem:[%s334] sm:$0xf]
                  %337 = vst [vmem:[%s335] sm:$0xf] %v336
                  %v338 = vld [vmem:[%s334 + $0x4] sm:$0xf]
                  %339 = vst [vmem:[%s335 + $0x4] sm:$0xf] %v338
                  %v340 = vld [vmem:[%s334 + $0x10] sm:$0xf]
                  %341 = vst [vmem:[%s335 + $0x8] sm:$0xf] %v340
                  %v342 = vld [vmem:[%s334 + $0x14] sm:$0xf]
                  %343 = vst [vmem:[%s335 + $0xc] sm:$0xf] %v342
                  %v344 = vld [vmem:[%s334 + $0x20] sm:$0xf]
                  %345 = vst [vmem:[%s335 + $0x10] sm:$0xf] %v344
                  %v346 = vld [vmem:[%s334 + $0x24] sm:$0xf]
                  %347 = vst [vmem:[%s335 + $0x14] sm:$0xf] %v346
                  %v348 = vld [vmem:[%s334 + $0x30] sm:$0xf]
                  %349 = vst [vmem:[%s335 + $0x18] sm:$0xf] %v348
                  %v350 = vld [vmem:[%s334 + $0x34] sm:$0xf]
                  %351 = vst [vmem:[%s335 + $0x1c] sm:$0xf] %v350
                  %v352 = vld [vmem:[%s334 + $0x40] sm:$0xf]
                  %353 = vst [vmem:[%s335 + $0x20] sm:$0xf] %v352
                  %v354 = vld [vmem:[%s334 + $0x44] sm:$0xf]
                  %355 = vst [vmem:[%s335 + $0x24] sm:$0xf] %v354
                  %v356 = vld [vmem:[%s334 + $0x50] sm:$0xf]
                  %357 = vst [vmem:[%s335 + $0x28] sm:$0xf] %v356
                  %v358 = vld [vmem:[%s334 + $0x54] sm:$0xf]
                  %359 = vst [vmem:[%s335 + $0x2c] sm:$0xf] %v358
                  %v360 = vld [vmem:[%s334 + $0x60] sm:$0xf]
                  %361 = vst [vmem:[%s335 + $0x30] sm:$0xf] %v360
                  %v362 = vld [vmem:[%s334 + $0x64] sm:$0xf]
                  %363 = vst [vmem:[%s335 + $0x34] sm:$0xf] %v362
                  %v364 = vld [vmem:[%s334 + $0x70] sm:$0xf]
                  %365 = vst [vmem:[%s335 + $0x38] sm:$0xf] %v364
                  %v366 = vld [vmem:[%s334 + $0x74] sm:$0xf]
                  %367 = vst [vmem:[%s335 + $0x3c] sm:$0xf] %v366
                  %v368 = vld [vmem:[%s334 + $0x80] sm:$0xf]
                  %369 = vst [vmem:[%s335 + $0x40] sm:$0xf] %v368
                  %v370 = vld [vmem:[%s334 + $0x84] sm:$0xf]
                  %371 = vst [vmem:[%s335 + $0x44] sm:$0xf] %v370
                  %v372 = vld [vmem:[%s334 + $0x90] sm:$0xf]
                  %373 = vst [vmem:[%s335 + $0x48] sm:$0xf] %v372
                  %v374 = vld [vmem:[%s334 + $0x94] sm:$0xf]
                  %375 = vst [vmem:[%s335 + $0x4c] sm:$0xf] %v374
                  %v376 = vld [vmem:[%s334 + $0xa0] sm:$0xf]
                  %377 = vst [vmem:[%s335 + $0x50] sm:$0xf] %v376
                  %v378 = vld [vmem:[%s334 + $0xa4] sm:$0xf]
                  %379 = vst [vmem:[%s335 + $0x54] sm:$0xf] %v378
                  %v380 = vld [vmem:[%s334 + $0xb0] sm:$0xf]
                  %381 = vst [vmem:[%s335 + $0x58] sm:$0xf] %v380
                  %v382 = vld [vmem:[%s334 + $0xb4] sm:$0xf]
                  %383 = vst [vmem:[%s335 + $0x5c] sm:$0xf] %v382
                  %v384 = vld [vmem:[%s334 + $0xc0] sm:$0xf]
                  %385 = vst [vmem:[%s335 + $0x60] sm:$0xf] %v384
                  %v386 = vld [vmem:[%s334 + $0xc4] sm:$0xf]
                  %387 = vst [vmem:[%s335 + $0x64] sm:$0xf] %v386
                  %v388 = vld [vmem:[%s334 + $0xd0] sm:$0xf]
                  %389 = vst [vmem:[%s335 + $0x68] sm:$0xf] %v388
                  %v390 = vld [vmem:[%s334 + $0xd4] sm:$0xf]
                  %391 = vst [vmem:[%s335 + $0x6c] sm:$0xf] %v390
                  %v392 = vld [vmem:[%s334 + $0xe0] sm:$0xf]
                  %393 = vst [vmem:[%s335 + $0x70] sm:$0xf] %v392
                  %v394 = vld [vmem:[%s334 + $0xe4] sm:$0xf]
                  %395 = vst [vmem:[%s335 + $0x74] sm:$0xf] %v394
                  %v396 = vld [vmem:[%s334 + $0xf0] sm:$0xf]
                  %397 = vst [vmem:[%s335 + $0x78] sm:$0xf] %v396
                  %v398 = vld [vmem:[%s334 + $0xf4] sm:$0xf]
                  %399 = vst [vmem:[%s335 + $0x7c] sm:$0xf] %v398
                $region79: #{ibmcnn_forward.1} parent=66 // loop_footer
                  %s333 = sadd.s32 1, %s329
                $region80: #{ibmcnn_forward.1} parent=66 // loop_footer_branch
                  %328 = sbr.rel target = $region76
                $region81: #{ibmcnn_forward.1} parent=66 // loop_exit
                  _
              $region67: #{ibmcnn_forward.1} parent=51 // pred_fallthru
                _
            $region52: #{ibmcnn_forward.1} parent=47 // pred_fallthru
              _
            // Predicated region
            $region53: #{ibmcnn_forward.1} parent=47 // pred_check
              _
            $region54: #{ibmcnn_forward.1} parent=47 // pred_check_branch
              %243 = sbr.rel (0) target = $region56
            $region55: #{ibmcnn_forward.1} parent=47 // pred_region
              loop: start=0, step=1, limit=1
              $region57: #{ibmcnn_forward.1} parent=55 // loop_pre_header
                _
              $region58: #{ibmcnn_forward.1} parent=55 // loop_header
                %s246 = sphi 0, %s250
                %p247 = scmp.ge.s32.totalorder %s246, 1
                %s251 = sphi %s237, %s237
                %s252 = sphi %s234, %s234
              $region59: #{ibmcnn_forward.1} parent=55 // loop_header_branch
                %249 = sbr.rel (%p247) target = $region63
              $region60: #{ibmcnn_forward.1} parent=55 // loop_body
                %v253 = vld [vmem:[%s251] sm:$0xf]
                %254 = vst [vmem:[%s252] sm:$0xf] %v253
                %v255 = vld [vmem:[%s251 + $0x4] sm:$0xf]
                %256 = vst [vmem:[%s252 + $0x4] sm:$0xf] %v255
                %v257 = vld [vmem:[%s251 + $0x10] sm:$0xf]
                %258 = vst [vmem:[%s252 + $0x8] sm:$0xf] %v257
                %v259 = vld [vmem:[%s251 + $0x14] sm:$0xf]
                %260 = vst [vmem:[%s252 + $0xc] sm:$0xf] %v259
                %v261 = vld [vmem:[%s251 + $0x20] sm:$0xf]
                %262 = vst [vmem:[%s252 + $0x10] sm:$0xf] %v261
                %v263 = vld [vmem:[%s251 + $0x24] sm:$0xf]
                %264 = vst [vmem:[%s252 + $0x14] sm:$0xf] %v263
                %v265 = vld [vmem:[%s251 + $0x30] sm:$0xf]
                %266 = vst [vmem:[%s252 + $0x18] sm:$0xf] %v265
                %v267 = vld [vmem:[%s251 + $0x34] sm:$0xf]
                %268 = vst [vmem:[%s252 + $0x1c] sm:$0xf] %v267
                %v269 = vld [vmem:[%s251 + $0x40] sm:$0xf]
                %270 = vst [vmem:[%s252 + $0x20] sm:$0xf] %v269
                %v271 = vld [vmem:[%s251 + $0x44] sm:$0xf]
                %272 = vst [vmem:[%s252 + $0x24] sm:$0xf] %v271
                %v273 = vld [vmem:[%s251 + $0x50] sm:$0xf]
                %274 = vst [vmem:[%s252 + $0x28] sm:$0xf] %v273
                %v275 = vld [vmem:[%s251 + $0x54] sm:$0xf]
                %276 = vst [vmem:[%s252 + $0x2c] sm:$0xf] %v275
                %v277 = vld [vmem:[%s251 + $0x60] sm:$0xf]
                %278 = vst [vmem:[%s252 + $0x30] sm:$0xf] %v277
                %v279 = vld [vmem:[%s251 + $0x64] sm:$0xf]
                %280 = vst [vmem:[%s252 + $0x34] sm:$0xf] %v279
                %v281 = vld [vmem:[%s251 + $0x70] sm:$0xf]
                %282 = vst [vmem:[%s252 + $0x38] sm:$0xf] %v281
                %v283 = vld [vmem:[%s251 + $0x74] sm:$0xf]
                %284 = vst [vmem:[%s252 + $0x3c] sm:$0xf] %v283
                %v285 = vld [vmem:[%s251 + $0x80] sm:$0xf]
                %286 = vst [vmem:[%s252 + $0x40] sm:$0xf] %v285
                %v287 = vld [vmem:[%s251 + $0x84] sm:$0xf]
                %288 = vst [vmem:[%s252 + $0x44] sm:$0xf] %v287
                %v289 = vld [vmem:[%s251 + $0x90] sm:$0xf]
                %290 = vst [vmem:[%s252 + $0x48] sm:$0xf] %v289
                %v291 = vld [vmem:[%s251 + $0x94] sm:$0xf]
                %292 = vst [vmem:[%s252 + $0x4c] sm:$0xf] %v291
                %v293 = vld [vmem:[%s251 + $0xa0] sm:$0xf]
                %294 = vst [vmem:[%s252 + $0x50] sm:$0xf] %v293
                %v295 = vld [vmem:[%s251 + $0xa4] sm:$0xf]
                %296 = vst [vmem:[%s252 + $0x54] sm:$0xf] %v295
                %v297 = vld [vmem:[%s251 + $0xb0] sm:$0xf]
                %298 = vst [vmem:[%s252 + $0x58] sm:$0xf] %v297
                %v299 = vld [vmem:[%s251 + $0xb4] sm:$0xf]
                %300 = vst [vmem:[%s252 + $0x5c] sm:$0xf] %v299
                %v301 = vld [vmem:[%s251 + $0xc0] sm:$0xf]
                %302 = vst [vmem:[%s252 + $0x60] sm:$0xf] %v301
                %v303 = vld [vmem:[%s251 + $0xc4] sm:$0xf]
                %304 = vst [vmem:[%s252 + $0x64] sm:$0xf] %v303
                %v305 = vld [vmem:[%s251 + $0xd0] sm:$0xf]
                %306 = vst [vmem:[%s252 + $0x68] sm:$0xf] %v305
                %v307 = vld [vmem:[%s251 + $0xd4] sm:$0xf]
                %308 = vst [vmem:[%s252 + $0x6c] sm:$0xf] %v307
                %v309 = vld [vmem:[%s251 + $0xe0] sm:$0xf]
                %310 = vst [vmem:[%s252 + $0x70] sm:$0xf] %v309
                %v311 = vld [vmem:[%s251 + $0xe4] sm:$0xf]
                %312 = vst [vmem:[%s252 + $0x74] sm:$0xf] %v311
                %v313 = vld [vmem:[%s251 + $0xf0] sm:$0xf]
                %314 = vst [vmem:[%s252 + $0x78] sm:$0xf] %v313
                %v315 = vld [vmem:[%s251 + $0xf4] sm:$0xf]
                %316 = vst [vmem:[%s252 + $0x7c] sm:$0xf] %v315
              $region61: #{ibmcnn_forward.1} parent=55 // loop_footer
                %s250 = sadd.s32 1, %s246
              $region62: #{ibmcnn_forward.1} parent=55 // loop_footer_branch
                %245 = sbr.rel target = $region58
              $region63: #{ibmcnn_forward.1} parent=55 // loop_exit
                _
            $region56: #{ibmcnn_forward.1} parent=47 // pred_fallthru
              _
          $region48: #{ibmcnn_forward.1} parent=43 // pred_fallthru
            _
          %400 = vnop
        $region44: #{ibmcnn_forward.1} parent=39 // pred_fallthru
          _
      $region40: #{ibmcnn_forward.1} parent=5 // pred_fallthru
        _
      %p401 = scmp.le.s32.totalorder 1, %s13
      %p402 = scmp.lt.s32.totalorder %s13, 3
      %p403 = pnand %p401, %p402
      %p404 = pneg %p403
      // Predicated region
      $region82: #{ibmcnn_forward.1} parent=5 // pred_check
        _
      $region83: #{ibmcnn_forward.1} parent=5 // pred_check_branch
        %406 = sbr.rel (%p403) target = $region85
      $region84: #{ibmcnn_forward.1} parent=5 // pred_region
        %s407 = ssub.s32 %s13, 1
        %s408 = sand.u32 %s26, 1
        %s409 = sand.u32 %s26, 1
        %s410 = smul.addr %s409, 128
        %s411 = scalar_lea.vmem [#allocation2], %s410
        // Predicated region
        $region86: #{ibmcnn_forward.1} parent=84 // pred_check
          %p412 = pneg %p39
        $region87: #{ibmcnn_forward.1} parent=84 // pred_check_branch
          %414 = sbr.rel (%p412) target = $region89
        $region88: #{ibmcnn_forward.1} parent=84 // pred_region
          _
        $region89: #{ibmcnn_forward.1} parent=84 // pred_fallthru
          _
        %s415 = sand.u32 %s26, 1
        %s416 = sand.u32 %s26, 1
        %s417 = smul.addr %s416, 128
        %s418 = scalar_lea.vmem [#allocation2], %s417
        %p419 = pneg %p39
        %p420 = pneg %p36
        %p421 = pneg %p60
        %p422 = pneg %p57
        %p423 = pneg %p81
        %p424 = pneg %p78
        %p425 = pneg %p102
        %p426 = pneg %p99
        %p427 = pneg %p123
        %p428 = pneg %p120
        %p429 = pneg %p144
        %p430 = pneg %p141
        %p431 = pneg %p165
        %p432 = pneg %p162
        %p433 = pneg %p191
        %p434 = pneg %p188
        %s435 = smul.u32 2, %s18
        %p436 = scmp.lt.s32.totalorder %s435, 3
        %s437 = scalar_select %p436, %s435, 3
        %s438 = smul.addr %s437, 8
        %s439 = scalar_lea.vmem %s7, %s438
        %s440 = smul.u32 2, %s18
        %s441 = smul.u32 2, %s18
        %p442 = scmp.lt.s32.totalorder %s441, 3
        %s443 = scalar_select %p442, %s441, 3
        %s444 = smul.addr %s443, 8
        %s445 = scalar_lea.vmem %s7, %s444
        %s446 = smul.u32 2, %s18
        %v448 = vld [vmem:[%s411] sm:$0xf]
        %v449 = vld [vmem:[%s411 + $0x4] sm:$0xf]
        %v450 = vld [vmem:[%s411 + $0x8] sm:$0xf]
        %v451 = vld [vmem:[%s411 + $0xc] sm:$0xf]
        %v452 = vld [vmem:[%s411 + $0x10] sm:$0xf]
        %v453 = vld [vmem:[%s411 + $0x14] sm:$0xf]
        %v454 = vld [vmem:[%s411 + $0x18] sm:$0xf]
        %v455 = vld [vmem:[%s411 + $0x1c] sm:$0xf]
        %v456 = vld [vmem:[%s411 + $0x20] sm:$0xf]
        %v457 = vld [vmem:[%s411 + $0x24] sm:$0xf]
        %v458 = vld [vmem:[%s411 + $0x28] sm:$0xf]
        %v459 = vld [vmem:[%s411 + $0x2c] sm:$0xf]
        %v460 = vld [vmem:[%s411 + $0x30] sm:$0xf]
        %v461 = vld [vmem:[%s411 + $0x34] sm:$0xf]
        %v462 = vld [vmem:[%s411 + $0x38] sm:$0xf]
        %v463 = vld [vmem:[%s411 + $0x3c] sm:$0xf]
        %v464 = vld [vmem:[%s411 + $0x40] sm:$0xf]
        %v465 = vld [vmem:[%s411 + $0x44] sm:$0xf]
        %v466 = vld [vmem:[%s411 + $0x48] sm:$0xf]
        %v467 = vld [vmem:[%s411 + $0x4c] sm:$0xf]
        %v468 = vld [vmem:[%s411 + $0x50] sm:$0xf]
        %v469 = vld [vmem:[%s411 + $0x54] sm:$0xf]
        %v470 = vld [vmem:[%s411 + $0x58] sm:$0xf]
        %v471 = vld [vmem:[%s411 + $0x5c] sm:$0xf]
        %v472 = vld [vmem:[%s411 + $0x60] sm:$0xf]
        %v473 = vld [vmem:[%s411 + $0x64] sm:$0xf]
        %v474 = vld [vmem:[%s411 + $0x68] sm:$0xf]
        %v475 = vld [vmem:[%s411 + $0x6c] sm:$0xf]
        %v476 = vld [vmem:[%s411 + $0x70] sm:$0xf]
        %v477 = vld [vmem:[%s411 + $0x74] sm:$0xf]
        %v478 = vld [vmem:[%s411 + $0x78] sm:$0xf]
        %v479 = vld [vmem:[%s411 + $0x7c] sm:$0xf]
        %v480 = vld [vmem:[%s4] sm:$0x7]
        %v511 = vunpack.c.l.b16 %v448
        %v512 = vunpack.c.l.b16 %v449
        %v513 = vunpack.c.l.b16 %v450
        %v514 = vunpack.c.l.b16 %v451
        %v515 = vunpack.c.l.b16 %v452
        %v516 = vunpack.c.l.b16 %v453
        %v517 = vunpack.c.l.b16 %v454
        %v518 = vunpack.c.l.b16 %v455
        %v519 = vunpack.c.l.b16 %v456
        %v520 = vunpack.c.l.b16 %v457
        %v521 = vunpack.c.l.b16 %v458
        %v522 = vunpack.c.l.b16 %v459
        %v523 = vunpack.c.l.b16 %v460
        %v524 = vunpack.c.l.b16 %v461
        %v525 = vunpack.c.l.b16 %v462
        %v526 = vunpack.c.l.b16 %v463
        %v527 = vunpack.c.l.b16 %v464
        %v528 = vunpack.c.l.b16 %v465
        %v529 = vunpack.c.l.b16 %v466
        %v530 = vunpack.c.l.b16 %v467
        %v531 = vunpack.c.l.b16 %v468
        %v532 = vunpack.c.l.b16 %v469
        %v533 = vunpack.c.l.b16 %v470
        %v534 = vunpack.c.l.b16 %v471
        %v535 = vunpack.c.l.b16 %v472
        %v536 = vunpack.c.l.b16 %v473
        %v537 = vunpack.c.l.b16 %v474
        %v538 = vunpack.c.l.b16 %v475
        %v539 = vunpack.c.l.b16 %v476
        %v540 = vunpack.c.l.b16 %v477
        %v541 = vpack.c.b16 %v512, %v511
        %v542 = vpack.c.b16 %v514, %v513
        %v543 = vpack.c.b16 %v516, %v515
        %v544 = vpack.c.b16 %v518, %v517
        %v545 = vpack.c.b16 %v520, %v519
        %v546 = vpack.c.b16 %v522, %v521
        %v547 = vpack.c.b16 %v524, %v523
        %v548 = vpack.c.b16 %v526, %v525
        %v549 = vpack.c.b16 %v528, %v527
        %v550 = vpack.c.b16 %v530, %v529
        %v551 = vpack.c.b16 %v532, %v531
        %v552 = vpack.c.b16 %v534, %v533
        %v553 = vpack.c.b16 %v536, %v535
        %v554 = vpack.c.b16 %v538, %v537
        %v555 = vpack.c.b16 %v540, %v539
        %v558 = vunpack.c.l.b16 %v478
        %v559 = vunpack.c.l.b16 %v479
        %v560 = vpack.c.b16 %v559, %v558
        %561 = vrot.lane.b32.xlu0 %v542, 32
        %v562 = vpop.permute.xlu0 %561
        %563 = vrot.lane.b32.xlu0 %v543, 32
        %v564 = vpop.permute.xlu0 %563
        %565 = vrot.lane.b32.xlu0 %v544, 32
        %v566 = vpop.permute.xlu0 %565
        %567 = vrot.lane.b32.xlu0 %v545, 32
        %v568 = vpop.permute.xlu0 %567
        %569 = vrot.lane.b32.xlu0 %v546, 32
        %v570 = vpop.permute.xlu0 %569
        %571 = vrot.lane.b32.xlu0 %v547, 32
        %v572 = vpop.permute.xlu0 %571
        %573 = vrot.lane.b32.xlu0 %v548, 32
        %v574 = vpop.permute.xlu0 %573
        %575 = vrot.lane.b32.xlu0 %v549, 32
        %v576 = vpop.permute.xlu0 %575
        %577 = vrot.lane.b32.xlu0 %v550, 32
        %v578 = vpop.permute.xlu0 %577
        %579 = vrot.lane.b32.xlu0 %v551, 32
        %v580 = vpop.permute.xlu0 %579
        %581 = vrot.lane.b32.xlu0 %v552, 32
        %v582 = vpop.permute.xlu0 %581
        %583 = vrot.lane.b32.xlu0 %v553, 32
        %v584 = vpop.permute.xlu0 %583
        %585 = vrot.lane.b32.xlu0 %v554, 32
        %v586 = vpop.permute.xlu0 %585
        %587 = vrot.lane.b32.xlu0 %v555, 32
        %v588 = vpop.permute.xlu0 %587
        %589 = vrot.lane.b32.xlu0 %v560, 32
        %v590 = vpop.permute.xlu0 %589
        %vm591 = vcmask 261120
        %v594 = vsel %vm591, %v541, %v562
        %v597 = vsel %vm591, %v542, %v564
        %v600 = vsel %vm591, %v543, %v566
        %v603 = vsel %vm591, %v544, %v568
        %v606 = vsel %vm591, %v545, %v570
        %v609 = vsel %vm591, %v546, %v572
        %v612 = vsel %vm591, %v547, %v574
        %v615 = vsel %vm591, %v548, %v576
        %v618 = vsel %vm591, %v549, %v578
        %v621 = vsel %vm591, %v550, %v580
        %v624 = vsel %vm591, %v551, %v582
        %v627 = vsel %vm591, %v552, %v584
        %v630 = vsel %vm591, %v553, %v586
        %v633 = vsel %vm591, %v554, %v588
        %v636 = vsel %vm591, %v555, %v590
        %v637 = vld [vmem:[%s1] sm:$0xf]
        %v638 = vld [vmem:[%s1 + $0x4] sm:$0xf]
        %v639 = vld [vmem:[%s1 + $0x8] sm:$0xf]
        %v640 = vld [vmem:[%s1 + $0xc] sm:$0xf]
        %v641 = vld [vmem:[%s1 + $0x10] sm:$0xf]
        %v642 = vld [vmem:[%s1 + $0x14] sm:$0xf]
        %v643 = vld [vmem:[%s1 + $0x18] sm:$0xf]
        %v644 = vld [vmem:[%s1 + $0x1c] sm:$0xf]
        %v653 = vunpack.c.l.b16 %v637
        %v654 = vunpack.c.l.b16 %v638
        %v655 = vunpack.c.l.b16 %v639
        %v656 = vunpack.c.l.b16 %v640
        %v657 = vunpack.c.l.b16 %v641
        %v658 = vunpack.c.l.b16 %v642
        %v659 = vunpack.c.l.b16 %v643
        %v660 = vunpack.c.l.b16 %v644
        %v661 = vpack.c.b16 %v654, %v653
        %v662 = vpack.c.b16 %v656, %v655
        %v663 = vpack.c.b16 %v658, %v657
        %v664 = vpack.c.b16 %v660, %v659
        %vm669 = vcmask 523264
        %v670 = vsel %vm669, %v594, 0
        %v672 = vsel %vm669, %v597, 0
        %v674 = vsel %vm669, %v600, 0
        %v676 = vsel %vm669, %v603, 0
        %v678 = vsel %vm669, %v606, 0
        %v680 = vsel %vm669, %v609, 0
        %v682 = vsel %vm669, %v612, 0
        %v684 = vsel %vm669, %v615, 0
        %v686 = vsel %vm669, %v618, 0
        %v688 = vsel %vm669, %v621, 0
        %v690 = vsel %vm669, %v624, 0
        %v692 = vsel %vm669, %v627, 0
        %v694 = vsel %vm669, %v630, 0
        %v696 = vsel %vm669, %v633, 0
        %v698 = vsel %vm669, %v636, 0
        %700 = vmatprep.subr.bf16.mxu0 0
        %701 = vmatpush1.bf16.msra.mxu0 %v661
        %702 = vmatprep.subr.bf16.mxu0 0
        %703 = vmatpush1.bf16.msra.mxu0 %v662
        %704 = vmatprep.subr.bf16.mxu0 0
        %705 = vmatpush1.bf16.msra.mxu0 %v663
        %706 = vmatprep.subr.bf16.mxu0 0
        %707 = vmatpush1.bf16.msra.mxu0 %v664
        %708 = vmatprep.subr.bf16.mxu0 0
        %709 = vmatpush1.bf16.msra.mxu0 0
        %710 = vmatprep.subr.bf16.mxu0 0
        %711 = vmatpush1.bf16.msra.mxu0 0
        %712 = vmatprep.subr.bf16.mxu0 0
        %713 = vmatpush1.bf16.msra.mxu0 0
        %714 = vmatprep.subr.bf16.mxu0 0
        %715 = vmatpush1.bf16.msra.mxu0 0
        %716 = vmatprep.subr.bf16.mxu0 0
        %717 = vmatpush1.bf16.msra.mxu0 0
        %718 = vmatprep.subr.bf16.mxu0 0
        %719 = vmatpush1.bf16.msra.mxu0 0
        %720 = vmatprep.subr.bf16.mxu0 0
        %721 = vmatpush1.bf16.msra.mxu0 0
        %722 = vmatprep.subr.bf16.mxu0 0
        %723 = vmatpush1.bf16.msra.mxu0 0
        %724 = vmatprep.subr.bf16.mxu0 0
        %725 = vmatpush1.bf16.msra.mxu0 0
        %726 = vmatprep.subr.bf16.mxu0 0
        %727 = vmatpush1.bf16.msra.mxu0 0
        %728 = vmatprep.subr.bf16.mxu0 0
        %729 = vmatpush1.bf16.msra.mxu0 0
        %730 = vmatprep.subr.bf16.mxu0 0
        %731 = vmatpush1.bf16.msra.mxu0 0
        %732 = vmatprep.mubr.bf16.mxu0 0
        %733 = vmatmul.mubr.bf16.gmra.mrb[0].mxu0 %v670
        %v734 = vpop.f32.mrb[0].mxu0
        %v735 = vadd.f32 0.0, %v734
        %v736 = vpop.f32.mrb[0].mxu0
        %v737 = vpop.f32.mrb[0].mxu0
        %v738 = vadd.f32 0.0, %v737
        %v739 = vpop.f32.mrb[0].mxu0
        %740 = vmatprep.mubr.bf16.mxu0 0
        %741 = vmatmul.mubr.bf16.gmra.mrb[0].mxu0 %v672
        %v742 = vpop.f32.mrb[0].mxu0
        %v743 = vadd.f32 0.0, %v742
        %v744 = vpop.f32.mrb[0].mxu0
        %v745 = vpop.f32.mrb[0].mxu0
        %v746 = vadd.f32 0.0, %v745
        %v747 = vpop.f32.mrb[0].mxu0
        %748 = vmatprep.mubr.bf16.mxu0 0
        %749 = vmatmul.mubr.bf16.gmra.mrb[0].mxu0 %v674
        %v750 = vpop.f32.mrb[0].mxu0
        %v751 = vadd.f32 0.0, %v750
        %v752 = vpop.f32.mrb[0].mxu0
        %v753 = vpop.f32.mrb[0].mxu0
        %v754 = vadd.f32 0.0, %v753
        %v755 = vpop.f32.mrb[0].mxu0
        %756 = vmatprep.mubr.bf16.mxu0 0
        %757 = vmatmul.mubr.bf16.gmra.mrb[0].mxu0 %v676
        %v758 = vpop.f32.mrb[0].mxu0
        %v759 = vadd.f32 0.0, %v758
        %v760 = vpop.f32.mrb[0].mxu0
        %v761 = vpop.f32.mrb[0].mxu0
        %v762 = vadd.f32 0.0, %v761
        %v763 = vpop.f32.mrb[0].mxu0
        %764 = vmatprep.mubr.bf16.mxu0 0
        %765 = vmatmul.mubr.bf16.gmra.mrb[0].mxu0 %v678
        %v766 = vpop.f32.mrb[0].mxu0
        %v767 = vadd.f32 0.0, %v766
        %v768 = vpop.f32.mrb[0].mxu0
        %v769 = vpop.f32.mrb[0].mxu0
        %v770 = vadd.f32 0.0, %v769
        %v771 = vpop.f32.mrb[0].mxu0
        %772 = vmatprep.mubr.bf16.mxu0 0
        %773 = vmatmul.mubr.bf16.gmra.mrb[0].mxu0 %v680
        %v774 = vpop.f32.mrb[0].mxu0
        %v775 = vadd.f32 0.0, %v774
        %v776 = vpop.f32.mrb[0].mxu0
        %v777 = vpop.f32.mrb[0].mxu0
        %v778 = vadd.f32 0.0, %v777
        %v779 = vpop.f32.mrb[0].mxu0
        %780 = vmatprep.mubr.bf16.mxu0 0
        %781 = vmatmul.mubr.bf16.gmra.mrb[0].mxu0 %v682
        %v782 = vpop.f32.mrb[0].mxu0
        %v783 = vadd.f32 0.0, %v782
        %v784 = vpop.f32.mrb[0].mxu0
        %v785 = vpop.f32.mrb[0].mxu0
        %v786 = vadd.f32 0.0, %v785
        %v787 = vpop.f32.mrb[0].mxu0
        %788 = vmatprep.mubr.bf16.mxu0 0
        %789 = vmatmul.mubr.bf16.gmra.mrb[0].mxu0 %v684
        %v790 = vpop.f32.mrb[0].mxu0
        %v791 = vadd.f32 0.0, %v790
        %v792 = vpop.f32.mrb[0].mxu0
        %v793 = vpop.f32.mrb[0].mxu0
        %v794 = vadd.f32 0.0, %v793
        %v795 = vpop.f32.mrb[0].mxu0
        %796 = vmatprep.mubr.bf16.mxu0 0
        %797 = vmatmul.mubr.bf16.gmra.mrb[0].mxu0 %v686
        %v798 = vpop.f32.mrb[0].mxu0
        %v799 = vadd.f32 0.0, %v798
        %v800 = vpop.f32.mrb[0].mxu0
        %v801 = vpop.f32.mrb[0].mxu0
        %v802 = vadd.f32 0.0, %v801
        %v803 = vpop.f32.mrb[0].mxu0
        %804 = vmatprep.mubr.bf16.mxu0 0
        %805 = vmatmul.mubr.bf16.gmra.mrb[0].mxu0 %v688
        %v806 = vpop.f32.mrb[0].mxu0
        %v807 = vadd.f32 0.0, %v806
        %v808 = vpop.f32.mrb[0].mxu0
        %v809 = vpop.f32.mrb[0].mxu0
        %v810 = vadd.f32 0.0, %v809
        %v811 = vpop.f32.mrb[0].mxu0
        %812 = vmatprep.mubr.bf16.mxu0 0
        %813 = vmatmul.mubr.bf16.gmra.mrb[0].mxu0 %v690
        %v814 = vpop.f32.mrb[0].mxu0
        %v815 = vadd.f32 0.0, %v814
        %v816 = vpop.f32.mrb[0].mxu0
        %v817 = vpop.f32.mrb[0].mxu0
        %v818 = vadd.f32 0.0, %v817
        %v819 = vpop.f32.mrb[0].mxu0
        %820 = vmatprep.mubr.bf16.mxu0 0
        %821 = vmatmul.mubr.bf16.gmra.mrb[0].mxu0 %v692
        %v822 = vpop.f32.mrb[0].mxu0
        %v823 = vadd.f32 0.0, %v822
        %v824 = vpop.f32.mrb[0].mxu0
        %v825 = vpop.f32.mrb[0].mxu0
        %v826 = vadd.f32 0.0, %v825
        %v827 = vpop.f32.mrb[0].mxu0
        %828 = vmatprep.mubr.bf16.mxu0 0
        %829 = vmatmul.mubr.bf16.gmra.mrb[0].mxu0 %v694
        %v830 = vpop.f32.mrb[0].mxu0
        %v831 = vadd.f32 0.0, %v830
        %v832 = vpop.f32.mrb[0].mxu0
        %v833 = vpop.f32.mrb[0].mxu0
        %v834 = vadd.f32 0.0, %v833
        %v835 = vpop.f32.mrb[0].mxu0
        %836 = vmatprep.mubr.bf16.mxu0 0
        %837 = vmatmul.mubr.bf16.gmra.mrb[0].mxu0 %v696
        %v838 = vpop.f32.mrb[0].mxu0
        %v839 = vadd.f32 0.0, %v838
        %v840 = vpop.f32.mrb[0].mxu0
        %v841 = vpop.f32.mrb[0].mxu0
        %v842 = vadd.f32 0.0, %v841
        %v843 = vpop.f32.mrb[0].mxu0
        %844 = vmatprep.mubr.bf16.mxu0 0
        %845 = vmatmul.mubr.bf16.gmra.mrb[0].mxu0 %v698
        %v846 = vpop.f32.mrb[0].mxu0
        %v847 = vadd.f32 0.0, %v846
        %v848 = vpop.f32.mrb[0].mxu0
        %v849 = vpop.f32.mrb[0].mxu0
        %v850 = vadd.f32 0.0, %v849
        %v851 = vpop.f32.mrb[0].mxu0
        %852 = vdwg.mxu0
        %v853 = vmax.f32 %v735, %v751
        %v854 = vmax.f32 %v743, %v759
        %v855 = vmax.f32 %v853, %v767
        %v856 = vmax.f32 %v854, %v775
        %v857 = vmax.f32 %v855, %v783
        %v858 = vmax.f32 %v856, %v791
        %v859 = vmax.f32 %v857, %v799
        %v860 = vmax.f32 %v858, %v807
        %v861 = vmax.f32 %v859, %v815
        %v862 = vmax.f32 %v860, %v823
        %v863 = vmax.f32 %v861, %v831
        %v864 = vmax.f32 %v862, %v839
        %v865 = vmax.f32 %v863, %v847
        %v866 = vmax.f32 %v865, %v864
        %v867 = vmax.f32 %v738, %v754
        %v868 = vmax.f32 %v746, %v762
        %v869 = vmax.f32 %v867, %v770
        %v870 = vmax.f32 %v868, %v778
        %v871 = vmax.f32 %v869, %v786
        %v872 = vmax.f32 %v870, %v794
        %v873 = vmax.f32 %v871, %v802
        %v874 = vmax.f32 %v872, %v810
        %v875 = vmax.f32 %v873, %v818
        %v876 = vmax.f32 %v874, %v826
        %v877 = vmax.f32 %v875, %v834
        %v878 = vmax.f32 %v876, %v842
        %v879 = vmax.f32 %v877, %v850
        %v880 = vmax.f32 %v879, %v878
        %v881 = vlaneseq
        %v882 = vshrl.u32 %v881, 7
        %v883 = vsub.s32 0, %v882
        %v884 = vrot.slane %v480, %v883
        %v885 = vadd.f32 %v866, %v884
        %v886 = vadd.f32 %v880, %v884
        %v887 = vmax.f32 %v885, 0.0
        %v888 = vmax.f32 %v886, 0.0
        %v889 = vpack.c.bf16 %v888, %v887
        %890 = vrot.lane.b32.xlu0 %v543, 64
        %v891 = vpop.permute.xlu0 %890
        %892 = vrot.lane.b32.xlu0 %v544, 64
        %v893 = vpop.permute.xlu0 %892
        %894 = vrot.lane.b32.xlu0 %v545, 64
        %v895 = vpop.permute.xlu0 %894
        %896 = vrot.lane.b32.xlu0 %v546, 64
        %v897 = vpop.permute.xlu0 %896
        %898 = vrot.lane.b32.xlu0 %v547, 64
        %v899 = vpop.permute.xlu0 %898
        %900 = vrot.lane.b32.xlu0 %v548, 64
        %v901 = vpop.permute.xlu0 %900
        %902 = vrot.lane.b32.xlu0 %v549, 64
        %v903 = vpop.permute.xlu0 %902
        %904 = vrot.lane.b32.xlu0 %v550, 64
        %v905 = vpop.permute.xlu0 %904
        %906 = vrot.lane.b32.xlu0 %v551, 64
        %v907 = vpop.permute.xlu0 %906
        %908 = vrot.lane.b32.xlu0 %v552, 64
        %v909 = vpop.permute.xlu0 %908
        %910 = vrot.lane.b32.xlu0 %v553, 64
        %v911 = vpop.permute.xlu0 %910
        %912 = vrot.lane.b32.xlu0 %v554, 64
        %v913 = vpop.permute.xlu0 %912
        %914 = vrot.lane.b32.xlu0 %v555, 64
        %v915 = vpop.permute.xlu0 %914
        %916 = vrot.lane.b32.xlu0 %v560, 64
        %v917 = vpop.permute.xlu0 %916
        %v919 = vsel %vm669, %v594, %v891
        %v921 = vsel %vm669, %v597, %v893
        %v923 = vsel %vm669, %v600, %v895
        %v925 = vsel %vm669, %v603, %v897
        %v927 = vsel %vm669, %v606, %v899
        %v929 = vsel %vm669, %v609, %v901
        %v931 = vsel %vm669, %v612, %v903
        %v933 = vsel %vm669, %v615, %v905
        %v935 = vsel %vm669, %v618, %v907
        %v937 = vsel %vm669, %v621, %v909
        %v939 = vsel %vm669, %v624, %v911
        %v941 = vsel %vm669, %v627, %v913
        %v943 = vsel %vm669, %v630, %v915
        %v945 = vsel %vm669, %v633, %v917
        %v946 = vld [vmem:[%s2] sm:$0xf]
        %v947 = vld [vmem:[%s2 + $0x4] sm:$0xf]
        %v948 = vld [vmem:[%s2 + $0x8] sm:$0xf]
        %v949 = vld [vmem:[%s2 + $0xc] sm:$0xf]
        %v950 = vld [vmem:[%s2 + $0x10] sm:$0xf]
        %v951 = vld [vmem:[%s2 + $0x14] sm:$0xf]
        %v952 = vld [vmem:[%s2 + $0x18] sm:$0xf]
        %v953 = vld [vmem:[%s2 + $0x1c] sm:$0xf]
        %v954 = vld [vmem:[%s2 + $0x20] sm:$0xf]
        %v955 = vld [vmem:[%s2 + $0x24] sm:$0xf]
        %v956 = vld [vmem:[%s2 + $0x28] sm:$0xf]
        %v957 = vld [vmem:[%s2 + $0x2c] sm:$0xf]
        %v970 = vunpack.c.l.b16 %v946
        %v971 = vunpack.c.l.b16 %v947
        %v972 = vunpack.c.l.b16 %v948
        %v973 = vunpack.c.l.b16 %v949
        %v974 = vunpack.c.l.b16 %v950
        %v975 = vunpack.c.l.b16 %v951
        %v976 = vunpack.c.l.b16 %v952
        %v977 = vunpack.c.l.b16 %v953
        %v978 = vunpack.c.l.b16 %v954
        %v979 = vunpack.c.l.b16 %v955
        %v980 = vunpack.c.l.b16 %v956
        %v981 = vunpack.c.l.b16 %v957
        %v982 = vpack.c.b16 %v971, %v970
        %v983 = vpack.c.b16 %v973, %v972
        %v984 = vpack.c.b16 %v975, %v974
        %v985 = vpack.c.b16 %v977, %v976
        %v986 = vpack.c.b16 %v979, %v978
        %v987 = vpack.c.b16 %v981, %v980
        %vm994 = vcmask 785408
        %v995 = vsel %vm994, %v919, 0
        %v997 = vsel %vm994, %v921, 0
        %v999 = vsel %vm994, %v923, 0
        %v1001 = vsel %vm994, %v925, 0
        %v1003 = vsel %vm994, %v927, 0
        %v1005 = vsel %vm994, %v929, 0
        %v1007 = vsel %vm994, %v931, 0
        %v1009 = vsel %vm994, %v933, 0
        %v1011 = vsel %vm994, %v935, 0
        %v1013 = vsel %vm994, %v937, 0
        %v1015 = vsel %vm994, %v939, 0
        %v1017 = vsel %vm994, %v941, 0
        %v1019 = vsel %vm994, %v943, 0
        %v1021 = vsel %vm994, %v945, 0
        %1023 = vmatprep.subr.bf16.mxu0 0
        %1024 = vmatpush1.bf16.msra.mxu0 %v982
        %1025 = vmatprep.subr.bf16.mxu0 0
        %1026 = vmatpush1.bf16.msra.mxu0 %v983
        %1027 = vmatprep.subr.bf16.mxu0 0
        %1028 = vmatpush1.bf16.msra.mxu0 %v984
        %1029 = vmatprep.subr.bf16.mxu0 0
        %1030 = vmatpush1.bf16.msra.mxu0 %v985
        %1031 = vmatprep.subr.bf16.mxu0 0
        %1032 = vmatpush1.bf16.msra.mxu0 %v986
        %1033 = vmatprep.subr.bf16.mxu0 0
        %1034 = vmatpush1.bf16.msra.mxu0 %v987
        %1035 = vmatprep.subr.bf16.mxu0 0
        %1036 = vmatpush1.bf16.msra.mxu0 0
        %1037 = vmatprep.subr.bf16.mxu0 0
        %1038 = vmatpush1.bf16.msra.mxu0 0
        %1039 = vmatprep.subr.bf16.mxu0 0
        %1040 = vmatpush1.bf16.msra.mxu0 0
        %1041 = vmatprep.subr.bf16.mxu0 0
        %1042 = vmatpush1.bf16.msra.mxu0 0
        %1043 = vmatprep.subr.bf16.mxu0 0
        %1044 = vmatpush1.bf16.msra.mxu0 0
        %1045 = vmatprep.subr.bf16.mxu0 0
        %1046 = vmatpush1.bf16.msra.mxu0 0
        %1047 = vmatprep.subr.bf16.mxu0 0
        %1048 = vmatpush1.bf16.msra.mxu0 0
        %1049 = vmatprep.subr.bf16.mxu0 0
        %1050 = vmatpush1.bf16.msra.mxu0 0
        %1051 = vmatprep.subr.bf16.mxu0 0
        %1052 = vmatpush1.bf16.msra.mxu0 0
        %1053 = vmatprep.subr.bf16.mxu0 0
        %1054 = vmatpush1.bf16.msra.mxu0 0
        %1055 = vmatprep.mubr.bf16.mxu0 0
        %1056 = vmatmul.mubr.bf16.gmra.mrb[0].mxu0 %v995
        %v1057 = vpop.f32.mrb[0].mxu0
        %v1058 = vadd.f32 0.0, %v1057
        %v1059 = vpop.f32.mrb[0].mxu0
        %v1060 = vpop.f32.mrb[0].mxu0
        %v1061 = vadd.f32 0.0, %v1060
        %v1062 = vpop.f32.mrb[0].mxu0
        %1063 = vmatprep.mubr.bf16.mxu0 0
        %1064 = vmatmul.mubr.bf16.gmra.mrb[0].mxu0 %v997
        %v1065 = vpop.f32.mrb[0].mxu0
        %v1066 = vadd.f32 0.0, %v1065
        %v1067 = vpop.f32.mrb[0].mxu0
        %v1068 = vpop.f32.mrb[0].mxu0
        %v1069 = vadd.f32 0.0, %v1068
        %v1070 = vpop.f32.mrb[0].mxu0
        %1071 = vmatprep.mubr.bf16.mxu0 0
        %1072 = vmatmul.mubr.bf16.gmra.mrb[0].mxu0 %v999
        %v1073 = vpop.f32.mrb[0].mxu0
        %v1074 = vadd.f32 0.0, %v1073
        %v1075 = vpop.f32.mrb[0].mxu0
        %v1076 = vpop.f32.mrb[0].mxu0
        %v1077 = vadd.f32 0.0, %v1076
        %v1078 = vpop.f32.mrb[0].mxu0
        %1079 = vmatprep.mubr.bf16.mxu0 0
        %1080 = vmatmul.mubr.bf16.gmra.mrb[0].mxu0 %v1001
        %v1081 = vpop.f32.mrb[0].mxu0
        %v1082 = vadd.f32 0.0, %v1081
        %v1083 = vpop.f32.mrb[0].mxu0
        %v1084 = vpop.f32.mrb[0].mxu0
        %v1085 = vadd.f32 0.0, %v1084
        %v1086 = vpop.f32.mrb[0].mxu0
        %1087 = vmatprep.mubr.bf16.mxu0 0
        %1088 = vmatmul.mubr.bf16.gmra.mrb[0].mxu0 %v1003
        %v1089 = vpop.f32.mrb[0].mxu0
        %v1090 = vadd.f32 0.0, %v1089
        %v1091 = vpop.f32.mrb[0].mxu0
        %v1092 = vpop.f32.mrb[0].mxu0
        %v1093 = vadd.f32 0.0, %v1092
        %v1094 = vpop.f32.mrb[0].mxu0
        %1095 = vmatprep.mubr.bf16.mxu0 0
        %1096 = vmatmul.mubr.bf16.gmra.mrb[0].mxu0 %v1005
        %v1097 = vpop.f32.mrb[0].mxu0
        %v1098 = vadd.f32 0.0, %v1097
        %v1099 = vpop.f32.mrb[0].mxu0
        %v1100 = vpop.f32.mrb[0].mxu0
        %v1101 = vadd.f32 0.0, %v1100
        %v1102 = vpop.f32.mrb[0].mxu0
        %1103 = vmatprep.mubr.bf16.mxu0 0
        %1104 = vmatmul.mubr.bf16.gmra.mrb[0].mxu0 %v1007
        %v1105 = vpop.f32.mrb[0].mxu0
        %v1106 = vadd.f32 0.0, %v1105
        %v1107 = vpop.f32.mrb[0].mxu0
        %v1108 = vpop.f32.mrb[0].mxu0
        %v1109 = vadd.f32 0.0, %v1108
        %v1110 = vpop.f32.mrb[0].mxu0
        %1111 = vmatprep.mubr.bf16.mxu0 0
        %1112 = vmatmul.mubr.bf16.gmra.mrb[0].mxu0 %v1009
        %v1113 = vpop.f32.mrb[0].mxu0
        %v1114 = vadd.f32 0.0, %v1113
        %v1115 = vpop.f32.mrb[0].mxu0
        %v1116 = vpop.f32.mrb[0].mxu0
        %v1117 = vadd.f32 0.0, %v1116
        %v1118 = vpop.f32.mrb[0].mxu0
        %1119 = vmatprep.mubr.bf16.mxu0 0
        %1120 = vmatmul.mubr.bf16.gmra.mrb[0].mxu0 %v1011
        %v1121 = vpop.f32.mrb[0].mxu0
        %v1122 = vadd.f32 0.0, %v1121
        %v1123 = vpop.f32.mrb[0].mxu0
        %v1124 = vpop.f32.mrb[0].mxu0
        %v1125 = vadd.f32 0.0, %v1124
        %v1126 = vpop.f32.mrb[0].mxu0
        %1127 = vmatprep.mubr.bf16.mxu0 0
        %1128 = vmatmul.mubr.bf16.gmra.mrb[0].mxu0 %v1013
        %v1129 = vpop.f32.mrb[0].mxu0
        %v1130 = vadd.f32 0.0, %v1129
        %v1131 = vpop.f32.mrb[0].mxu0
        %v1132 = vpop.f32.mrb[0].mxu0
        %v1133 = vadd.f32 0.0, %v1132
        %v1134 = vpop.f32.mrb[0].mxu0
        %1135 = vmatprep.mubr.bf16.mxu0 0
        %1136 = vmatmul.mubr.bf16.gmra.mrb[0].mxu0 %v1015
        %v1137 = vpop.f32.mrb[0].mxu0
        %v1138 = vadd.f32 0.0, %v1137
        %v1139 = vpop.f32.mrb[0].mxu0
        %v1140 = vpop.f32.mrb[0].mxu0
        %v1141 = vadd.f32 0.0, %v1140
        %v1142 = vpop.f32.mrb[0].mxu0
        %1143 = vmatprep.mubr.bf16.mxu0 0
        %1144 = vmatmul.mubr.bf16.gmra.mrb[0].mxu0 %v1017
        %v1145 = vpop.f32.mrb[0].mxu0
        %v1146 = vadd.f32 0.0, %v1145
        %v1147 = vpop.f32.mrb[0].mxu0
        %v1148 = vpop.f32.mrb[0].mxu0
        %v1149 = vadd.f32 0.0, %v1148
        %v1150 = vpop.f32.mrb[0].mxu0
        %1151 = vmatprep.mubr.bf16.mxu0 0
        %1152 = vmatmul.mubr.bf16.gmra.mrb[0].mxu0 %v1019
        %v1153 = vpop.f32.mrb[0].mxu0
        %v1154 = vadd.f32 0.0, %v1153
        %v1155 = vpop.f32.mrb[0].mxu0
        %v1156 = vpop.f32.mrb[0].mxu0
        %v1157 = vadd.f32 0.0, %v1156
        %v1158 = vpop.f32.mrb[0].mxu0
        %1159 = vmatprep.mubr.bf16.mxu0 0
        %1160 = vmatmul.mubr.bf16.gmra.mrb[0].mxu0 %v1021
        %v1161 = vpop.f32.mrb[0].mxu0
        %v1162 = vadd.f32 0.0, %v1161
        %v1163 = vpop.f32.mrb[0].mxu0
        %v1164 = vpop.f32.mrb[0].mxu0
        %v1165 = vadd.f32 0.0, %v1164
        %v1166 = vpop.f32.mrb[0].mxu0
        %1167 = vdwg.mxu0
        %v1168 = vmax.f32 %v1058, %v1074
        %v1169 = vmax.f32 %v1066, %v1082
        %v1170 = vmax.f32 %v1168, %v1090
        %v1171 = vmax.f32 %v1169, %v1098
        %v1172 = vmax.f32 %v1170, %v1106
        %v1173 = vmax.f32 %v1171, %v1114
        %v1174 = vmax.f32 %v1172, %v1122
        %v1175 = vmax.f32 %v1173, %v1130
        %v1176 = vmax.f32 %v1174, %v1138
        %v1177 = vmax.f32 %v1175, %v1146
        %v1178 = vmax.f32 %v1176, %v1154
        %v1179 = vmax.f32 %v1177, %v1162
        %v1180 = vmax.f32 %v1178, %v1179
        %v1181 = vmax.f32 %v1061, %v1077
        %v1182 = vmax.f32 %v1069, %v1085
        %v1183 = vmax.f32 %v1181, %v1093
        %v1184 = vmax.f32 %v1182, %v1101
        %v1185 = vmax.f32 %v1183, %v1109
        %v1186 = vmax.f32 %v1184, %v1117
        %v1187 = vmax.f32 %v1185, %v1125
        %v1188 = vmax.f32 %v1186, %v1133
        %v1189 = vmax.f32 %v1187, %v1141
        %v1190 = vmax.f32 %v1188, %v1149
        %v1191 = vmax.f32 %v1189, %v1157
        %v1192 = vmax.f32 %v1190, %v1165
        %v1193 = vmax.f32 %v1191, %v1192
        %v1194 = vlaneseq
        %v1195 = vshrl.u32 %v1194, 7
        %v1196 = vsub.s32 1, %v1195
        %v1197 = vrot.slane %v480, %v1196
        %v1198 = vadd.f32 %v1180, %v1197
        %v1199 = vadd.f32 %v1193, %v1197
        %v1200 = vmax.f32 %v1198, 0.0
        %v1201 = vmax.f32 %v1199, 0.0
        %v1202 = vpack.c.bf16 %v1201, %v1200
        %1203 = vrot.lane.b32.xlu0 %v544, 96
        %v1204 = vpop.permute.xlu0 %1203
        %1205 = vrot.lane.b32.xlu0 %v545, 96
        %v1206 = vpop.permute.xlu0 %1205
        %1207 = vrot.lane.b32.xlu0 %v546, 96
        %v1208 = vpop.permute.xlu0 %1207
        %1209 = vrot.lane.b32.xlu0 %v547, 96
        %v1210 = vpop.permute.xlu0 %1209
        %1211 = vrot.lane.b32.xlu0 %v548, 96
        %v1212 = vpop.permute.xlu0 %1211
        %1213 = vrot.lane.b32.xlu0 %v549, 96
        %v1214 = vpop.permute.xlu0 %1213
        %1215 = vrot.lane.b32.xlu0 %v550, 96
        %v1216 = vpop.permute.xlu0 %1215
        %1217 = vrot.lane.b32.xlu0 %v551, 96
        %v1218 = vpop.permute.xlu0 %1217
        %1219 = vrot.lane.b32.xlu0 %v552, 96
        %v1220 = vpop.permute.xlu0 %1219
        %1221 = vrot.lane.b32.xlu0 %v553, 96
        %v1222 = vpop.permute.xlu0 %1221
        %1223 = vrot.lane.b32.xlu0 %v554, 96
        %v1224 = vpop.permute.xlu0 %1223
        %1225 = vrot.lane.b32.xlu0 %v555, 96
        %v1226 = vpop.permute.xlu0 %1225
        %1227 = vrot.lane.b32.xlu0 %v560, 96
        %v1228 = vpop.permute.xlu0 %1227
        %v1230 = vsel %vm994, %v919, %v1204
        %v1233 = vsel %vm994, %v921, %v1206
        %v1236 = vsel %vm994, %v923, %v1208
        %v1239 = vsel %vm994, %v925, %v1210
        %v1242 = vsel %vm994, %v927, %v1212
        %v1245 = vsel %vm994, %v929, %v1214
        %v1248 = vsel %vm994, %v931, %v1216
        %v1251 = vsel %vm994, %v933, %v1218
        %v1254 = vsel %vm994, %v935, %v1220
        %v1257 = vsel %vm994, %v937, %v1222
        %v1260 = vsel %vm994, %v939, %v1224
        %v1263 = vsel %vm994, %v941, %v1226
        %v1266 = vsel %vm994, %v943, %v1228
        %v1268 = vld [vmem:[%s3] sm:$0xf]
        %v1269 = vld [vmem:[%s3 + $0x4] sm:$0xf]
        %v1270 = vld [vmem:[%s3 + $0x8] sm:$0xf]
        %v1271 = vld [vmem:[%s3 + $0xc] sm:$0xf]
        %v1272 = vld [vmem:[%s3 + $0x10] sm:$0xf]
        %v1273 = vld [vmem:[%s3 + $0x14] sm:$0xf]
        %v1274 = vld [vmem:[%s3 + $0x18] sm:$0xf]
        %v1275 = vld [vmem:[%s3 + $0x1c] sm:$0xf]
        %v1276 = vld [vmem:[%s3 + $0x20] sm:$0xf]
        %v1277 = vld [vmem:[%s3 + $0x24] sm:$0xf]
        %v1278 = vld [vmem:[%s3 + $0x28] sm:$0xf]
        %v1279 = vld [vmem:[%s3 + $0x2c] sm:$0xf]
        %v1280 = vld [vmem:[%s3 + $0x30] sm:$0xf]
        %v1281 = vld [vmem:[%s3 + $0x34] sm:$0xf]
        %v1282 = vld [vmem:[%s3 + $0x38] sm:$0xf]
        %v1283 = vld [vmem:[%s3 + $0x3c] sm:$0xf]
        %v1300 = vunpack.c.l.b16 %v1268
        %v1301 = vunpack.c.l.b16 %v1269
        %v1302 = vunpack.c.l.b16 %v1270
        %v1303 = vunpack.c.l.b16 %v1271
        %v1304 = vunpack.c.l.b16 %v1272
        %v1305 = vunpack.c.l.b16 %v1273
        %v1306 = vunpack.c.l.b16 %v1274
        %v1307 = vunpack.c.l.b16 %v1275
        %v1308 = vunpack.c.l.b16 %v1276
        %v1309 = vunpack.c.l.b16 %v1277
        %v1310 = vunpack.c.l.b16 %v1278
        %v1311 = vunpack.c.l.b16 %v1279
        %v1312 = vunpack.c.l.b16 %v1280
        %v1313 = vunpack.c.l.b16 %v1281
        %v1314 = vunpack.c.l.b16 %v1282
        %v1315 = vunpack.c.l.b16 %v1283
        %v1316 = vpack.c.b16 %v1301, %v1300
        %v1317 = vpack.c.b16 %v1303, %v1302
        %v1318 = vpack.c.b16 %v1305, %v1304
        %v1319 = vpack.c.b16 %v1307, %v1306
        %v1320 = vpack.c.b16 %v1309, %v1308
        %v1321 = vpack.c.b16 %v1311, %v1310
        %v1322 = vpack.c.b16 %v1313, %v1312
        %v1323 = vpack.c.b16 %v1315, %v1314
        %1332 = vmatprep.subr.bf16.mxu0 0
        %1333 = vmatpush1.bf16.msra.mxu0 %v1316
        %1334 = vmatprep.subr.bf16.mxu0 0
        %1335 = vmatpush1.bf16.msra.mxu0 %v1317
        %1336 = vmatprep.subr.bf16.mxu0 0
        %1337 = vmatpush1.bf16.msra.mxu0 %v1318
        %1338 = vmatprep.subr.bf16.mxu0 0
        %1339 = vmatpush1.bf16.msra.mxu0 %v1319
        %1340 = vmatprep.subr.bf16.mxu0 0
        %1341 = vmatpush1.bf16.msra.mxu0 %v1320
        %1342 = vmatprep.subr.bf16.mxu0 0
        %1343 = vmatpush1.bf16.msra.mxu0 %v1321
        %1344 = vmatprep.subr.bf16.mxu0 0
        %1345 = vmatpush1.bf16.msra.mxu0 %v1322
        %1346 = vmatprep.subr.bf16.mxu0 0
        %1347 = vmatpush1.bf16.msra.mxu0 %v1323
        %1348 = vmatprep.subr.bf16.mxu0 0
        %1349 = vmatpush1.bf16.msra.mxu0 0
        %1350 = vmatprep.subr.bf16.mxu0 0
        %1351 = vmatpush1.bf16.msra.mxu0 0
        %1352 = vmatprep.subr.bf16.mxu0 0
        %1353 = vmatpush1.bf16.msra.mxu0 0
        %1354 = vmatprep.subr.bf16.mxu0 0
        %1355 = vmatpush1.bf16.msra.mxu0 0
        %1356 = vmatprep.subr.bf16.mxu0 0
        %1357 = vmatpush1.bf16.msra.mxu0 0
        %1358 = vmatprep.subr.bf16.mxu0 0
        %1359 = vmatpush1.bf16.msra.mxu0 0
        %1360 = vmatprep.subr.bf16.mxu0 0
        %1361 = vmatpush1.bf16.msra.mxu0 0
        %1362 = vmatprep.subr.bf16.mxu0 0
        %1363 = vmatpush1.bf16.msra.mxu0 0
        %1364 = vmatprep.mubr.bf16.mxu0 0
        %1365 = vmatmul.mubr.bf16.gmra.mrb[0].mxu0 %v1230
        %v1366 = vpop.f32.mrb[0].mxu0
        %v1367 = vadd.f32 0.0, %v1366
        %v1368 = vpop.f32.mrb[0].mxu0
        %v1369 = vpop.f32.mrb[0].mxu0
        %v1370 = vadd.f32 0.0, %v1369
        %v1371 = vpop.f32.mrb[0].mxu0
        %1372 = vmatprep.mubr.bf16.mxu0 0
        %1373 = vmatmul.mubr.bf16.gmra.mrb[0].mxu0 %v1233
        %v1374 = vpop.f32.mrb[0].mxu0
        %v1375 = vadd.f32 0.0, %v1374
        %v1376 = vpop.f32.mrb[0].mxu0
        %v1377 = vpop.f32.mrb[0].mxu0
        %v1378 = vadd.f32 0.0, %v1377
        %v1379 = vpop.f32.mrb[0].mxu0
        %1380 = vmatprep.mubr.bf16.mxu0 0
        %1381 = vmatmul.mubr.bf16.gmra.mrb[0].mxu0 %v1236
        %v1382 = vpop.f32.mrb[0].mxu0
        %v1383 = vadd.f32 0.0, %v1382
        %v1384 = vpop.f32.mrb[0].mxu0
        %v1385 = vpop.f32.mrb[0].mxu0
        %v1386 = vadd.f32 0.0, %v1385
        %v1387 = vpop.f32.mrb[0].mxu0
        %1388 = vmatprep.mubr.bf16.mxu0 0
        %1389 = vmatmul.mubr.bf16.gmra.mrb[0].mxu0 %v1239
        %v1390 = vpop.f32.mrb[0].mxu0
        %v1391 = vadd.f32 0.0, %v1390
        %v1392 = vpop.f32.mrb[0].mxu0
        %v1393 = vpop.f32.mrb[0].mxu0
        %v1394 = vadd.f32 0.0, %v1393
        %v1395 = vpop.f32.mrb[0].mxu0
        %1396 = vmatprep.mubr.bf16.mxu0 0
        %1397 = vmatmul.mubr.bf16.gmra.mrb[0].mxu0 %v1242
        %v1398 = vpop.f32.mrb[0].mxu0
        %v1399 = vadd.f32 0.0, %v1398
        %v1400 = vpop.f32.mrb[0].mxu0
        %v1401 = vpop.f32.mrb[0].mxu0
        %v1402 = vadd.f32 0.0, %v1401
        %v1403 = vpop.f32.mrb[0].mxu0
        %1404 = vmatprep.mubr.bf16.mxu0 0
        %1405 = vmatmul.mubr.bf16.gmra.mrb[0].mxu0 %v1245
        %v1406 = vpop.f32.mrb[0].mxu0
        %v1407 = vadd.f32 0.0, %v1406
        %v1408 = vpop.f32.mrb[0].mxu0
        %v1409 = vpop.f32.mrb[0].mxu0
        %v1410 = vadd.f32 0.0, %v1409
        %v1411 = vpop.f32.mrb[0].mxu0
        %1412 = vmatprep.mubr.bf16.mxu0 0
        %1413 = vmatmul.mubr.bf16.gmra.mrb[0].mxu0 %v1248
        %v1414 = vpop.f32.mrb[0].mxu0
        %v1415 = vadd.f32 0.0, %v1414
        %v1416 = vpop.f32.mrb[0].mxu0
        %v1417 = vpop.f32.mrb[0].mxu0
        %v1418 = vadd.f32 0.0, %v1417
        %v1419 = vpop.f32.mrb[0].mxu0
        %1420 = vmatprep.mubr.bf16.mxu0 0
        %1421 = vmatmul.mubr.bf16.gmra.mrb[0].mxu0 %v1251
        %v1422 = vpop.f32.mrb[0].mxu0
        %v1423 = vadd.f32 0.0, %v1422
        %v1424 = vpop.f32.mrb[0].mxu0
        %v1425 = vpop.f32.mrb[0].mxu0
        %v1426 = vadd.f32 0.0, %v1425
        %v1427 = vpop.f32.mrb[0].mxu0
        %1428 = vmatprep.mubr.bf16.mxu0 0
        %1429 = vmatmul.mubr.bf16.gmra.mrb[0].mxu0 %v1254
        %v1430 = vpop.f32.mrb[0].mxu0
        %v1431 = vadd.f32 0.0, %v1430
        %v1432 = vpop.f32.mrb[0].mxu0
        %v1433 = vpop.f32.mrb[0].mxu0
        %v1434 = vadd.f32 0.0, %v1433
        %v1435 = vpop.f32.mrb[0].mxu0
        %1436 = vmatprep.mubr.bf16.mxu0 0
        %1437 = vmatmul.mubr.bf16.gmra.mrb[0].mxu0 %v1257
        %v1438 = vpop.f32.mrb[0].mxu0
        %v1439 = vadd.f32 0.0, %v1438
        %v1440 = vpop.f32.mrb[0].mxu0
        %v1441 = vpop.f32.mrb[0].mxu0
        %v1442 = vadd.f32 0.0, %v1441
        %v1443 = vpop.f32.mrb[0].mxu0
        %1444 = vmatprep.mubr.bf16.mxu0 0
        %1445 = vmatmul.mubr.bf16.gmra.mrb[0].mxu0 %v1260
        %v1446 = vpop.f32.mrb[0].mxu0
        %v1447 = vadd.f32 0.0, %v1446
        %v1448 = vpop.f32.mrb[0].mxu0
        %v1449 = vpop.f32.mrb[0].mxu0
        %v1450 = vadd.f32 0.0, %v1449
        %v1451 = vpop.f32.mrb[0].mxu0
        %1452 = vmatprep.mubr.bf16.mxu0 0
        %1453 = vmatmul.mubr.bf16.gmra.mrb[0].mxu0 %v1263
        %v1454 = vpop.f32.mrb[0].mxu0
        %v1455 = vadd.f32 0.0, %v1454
        %v1456 = vpop.f32.mrb[0].mxu0
        %v1457 = vpop.f32.mrb[0].mxu0
        %v1458 = vadd.f32 0.0, %v1457
        %v1459 = vpop.f32.mrb[0].mxu0
        %1460 = vmatprep.mubr.bf16.mxu0 0
        %1461 = vmatmul.mubr.bf16.gmra.mrb[0].mxu0 %v1266
        %v1462 = vpop.f32.mrb[0].mxu0
        %v1463 = vadd.f32 0.0, %v1462
        %v1464 = vpop.f32.mrb[0].mxu0
        %v1465 = vpop.f32.mrb[0].mxu0
        %v1466 = vadd.f32 0.0, %v1465
        %v1467 = vpop.f32.mrb[0].mxu0
        %1468 = vdwg.mxu0
        %v1469 = vmax.f32 %v1367, %v1383
        %v1470 = vmax.f32 %v1375, %v1391
        %v1471 = vmax.f32 %v1469, %v1399
        %v1472 = vmax.f32 %v1470, %v1407
        %v1473 = vmax.f32 %v1471, %v1415
        %v1474 = vmax.f32 %v1472, %v1423
        %v1475 = vmax.f32 %v1473, %v1431
        %v1476 = vmax.f32 %v1474, %v1439
        %v1477 = vmax.f32 %v1475, %v1447
        %v1478 = vmax.f32 %v1476, %v1455
        %v1479 = vmax.f32 %v1477, %v1463
        %v1480 = vmax.f32 %v1479, %v1478
        %v1481 = vmax.f32 %v1370, %v1386
        %v1482 = vmax.f32 %v1378, %v1394
        %v1483 = vmax.f32 %v1481, %v1402
        %v1484 = vmax.f32 %v1482, %v1410
        %v1485 = vmax.f32 %v1483, %v1418
        %v1486 = vmax.f32 %v1484, %v1426
        %v1487 = vmax.f32 %v1485, %v1434
        %v1488 = vmax.f32 %v1486, %v1442
        %v1489 = vmax.f32 %v1487, %v1450
        %v1490 = vmax.f32 %v1488, %v1458
        %v1491 = vmax.f32 %v1489, %v1466
        %v1492 = vmax.f32 %v1491, %v1490
        %v1493 = vlaneseq
        %v1494 = vshrl.u32 %v1493, 7
        %v1495 = vsub.s32 2, %v1494
        %v1496 = vrot.slane %v480, %v1495
        %v1497 = vadd.f32 %v1480, %v1496
        %v1498 = vadd.f32 %v1492, %v1496
        %v1499 = vmax.f32 %v1497, 0.0
        %v1500 = vmax.f32 %v1498, 0.0
        %v1501 = vpack.c.bf16 %v1500, %v1499
        %v1502 = vld [vmem:[%s5] sm:$0xf]
        %v1503 = vld [vmem:[%s5 + $0x4] sm:$0xf]
        %v1504 = vld [vmem:[%s5 + $0x8] sm:$0xf]
        %v1505 = vld [vmem:[%s5 + $0xc] sm:$0xf]
        %v1506 = vld [vmem:[%s5 + $0x10] sm:$0xf]
        %v1507 = vld [vmem:[%s5 + $0x14] sm:$0xf]
        %v1508 = vld [vmem:[%s5 + $0x18] sm:$0xf]
        %v1509 = vld [vmem:[%s5 + $0x1c] sm:$0xf]
        %v1510 = vld [vmem:[%s5 + $0x20] sm:$0xf]
        %v1511 = vld [vmem:[%s5 + $0x24] sm:$0xf]
        %v1512 = vld [vmem:[%s5 + $0x28] sm:$0xf]
        %v1513 = vld [vmem:[%s5 + $0x2c] sm:$0xf]
        %v1514 = vld [vmem:[%s5 + $0x30] sm:$0xf]
        %v1515 = vld [vmem:[%s5 + $0x34] sm:$0xf]
        %v1516 = vld [vmem:[%s5 + $0x38] sm:$0xf]
        %v1517 = vld [vmem:[%s5 + $0x3c] sm:$0xf]
        %v1518 = vld [vmem:[%s5 + $0x40] sm:$0xf]
        %v1519 = vld [vmem:[%s5 + $0x44] sm:$0xf]
        %v1520 = vld [vmem:[%s5 + $0x48] sm:$0xf]
        %v1521 = vld [vmem:[%s5 + $0x4c] sm:$0xf]
        %v1522 = vld [vmem:[%s5 + $0x50] sm:$0xf]
        %v1523 = vld [vmem:[%s5 + $0x54] sm:$0xf]
        %v1524 = vld [vmem:[%s5 + $0x58] sm:$0xf]
        %v1525 = vld [vmem:[%s5 + $0x5c] sm:$0xf]
        %v1526 = vld [vmem:[%s5 + $0x60] sm:$0xf]
        %v1527 = vld [vmem:[%s5 + $0x64] sm:$0xf]
        %v1528 = vld [vmem:[%s5 + $0x68] sm:$0xf]
        %v1529 = vld [vmem:[%s5 + $0x6c] sm:$0xf]
        %v1530 = vld [vmem:[%s5 + $0x70] sm:$0xf]
        %v1531 = vld [vmem:[%s5 + $0x74] sm:$0xf]
        %v1532 = vld [vmem:[%s5 + $0x78] sm:$0xf]
        %v1533 = vld [vmem:[%s5 + $0x7c] sm:$0xf]
        %v1534 = vld [vmem:[%s5 + $0x80] sm:$0xf]
        %v1535 = vld [vmem:[%s5 + $0x84] sm:$0xf]
        %v1536 = vld [vmem:[%s5 + $0x88] sm:$0xf]
        %v1537 = vld [vmem:[%s5 + $0x8c] sm:$0xf]
        %v1538 = vld [vmem:[%s5 + $0x90] sm:$0xf]
        %v1539 = vld [vmem:[%s5 + $0x94] sm:$0xf]
        %v1540 = vld [vmem:[%s5 + $0x98] sm:$0xf]
        %v1541 = vld [vmem:[%s5 + $0x9c] sm:$0xf]
        %v1542 = vld [vmem:[%s5 + $0xa0] sm:$0xf]
        %v1543 = vld [vmem:[%s5 + $0xa4] sm:$0xf]
        %v1544 = vld [vmem:[%s5 + $0xa8] sm:$0xf]
        %v1545 = vld [vmem:[%s5 + $0xac] sm:$0xf]
        %v1546 = vld [vmem:[%s5 + $0xb0] sm:$0xf]
        %v1547 = vld [vmem:[%s5 + $0xb4] sm:$0xf]
        %v1548 = vld [vmem:[%s5 + $0xb8] sm:$0xf]
        %v1549 = vld [vmem:[%s5 + $0xbc] sm:$0xf]
        %v1550 = vld [vmem:[%s6] sm:$0x1]
        %v1552 = vlaneseq
        %v1553 = vshrl.u32 %v1552, 7
        %v1554 = vsub.s32 0, %v1553
        %v1555 = vrot.slane %v1550, %v1554
        %v1605 = vunpack.c.l.b16 %v1502
        %v1606 = vunpack.c.l.b16 %v1503
        %v1607 = vunpack.c.l.b16 %v1504
        %v1608 = vunpack.c.l.b16 %v1505
        %v1609 = vunpack.c.l.b16 %v1506
        %v1610 = vunpack.c.l.b16 %v1507
        %v1611 = vunpack.c.l.b16 %v1508
        %v1612 = vunpack.c.l.b16 %v1509
        %v1613 = vunpack.c.l.b16 %v1510
        %v1614 = vunpack.c.l.b16 %v1511
        %v1615 = vunpack.c.l.b16 %v1512
        %v1616 = vunpack.c.l.b16 %v1513
        %v1617 = vunpack.c.l.b16 %v1514
        %v1618 = vunpack.c.l.b16 %v1515
        %v1619 = vunpack.c.l.b16 %v1516
        %v1620 = vunpack.c.l.b16 %v1517
        %v1621 = vunpack.c.l.b16 %v1518
        %v1622 = vunpack.c.l.b16 %v1519
        %v1623 = vunpack.c.l.b16 %v1520
        %v1624 = vunpack.c.l.b16 %v1521
        %v1625 = vunpack.c.l.b16 %v1522
        %v1626 = vunpack.c.l.b16 %v1523
        %v1627 = vunpack.c.l.b16 %v1524
        %v1628 = vunpack.c.l.b16 %v1525
        %v1629 = vunpack.c.l.b16 %v1526
        %v1630 = vunpack.c.l.b16 %v1527
        %v1631 = vunpack.c.l.b16 %v1528
        %v1632 = vunpack.c.l.b16 %v1529
        %v1633 = vunpack.c.l.b16 %v1530
        %v1634 = vunpack.c.l.b16 %v1531
        %v1635 = vunpack.c.l.b16 %v1532
        %v1636 = vunpack.c.l.b16 %v1533
        %v1637 = vunpack.c.l.b16 %v1534
        %v1638 = vunpack.c.l.b16 %v1535
        %v1639 = vunpack.c.l.b16 %v1536
        %v1640 = vunpack.c.l.b16 %v1537
        %v1641 = vunpack.c.l.b16 %v1538
        %v1642 = vunpack.c.l.b16 %v1539
        %v1643 = vunpack.c.l.b16 %v1540
        %v1644 = vunpack.c.l.b16 %v1541
        %v1645 = vunpack.c.l.b16 %v1542
        %v1646 = vunpack.c.l.b16 %v1543
        %v1647 = vunpack.c.l.b16 %v1544
        %v1648 = vunpack.c.l.b16 %v1545
        %v1649 = vunpack.c.l.b16 %v1546
        %v1650 = vunpack.c.l.b16 %v1547
        %v1651 = vunpack.c.l.b16 %v1548
        %v1652 = vunpack.c.l.b16 %v1549
        %v1653 = vpack.c.b16 %v1606, %v1605
        %v1654 = vpack.c.b16 %v1608, %v1607
        %v1655 = vpack.c.b16 %v1610, %v1609
        %v1656 = vpack.c.b16 %v1612, %v1611
        %v1657 = vpack.c.b16 %v1614, %v1613
        %v1658 = vpack.c.b16 %v1616, %v1615
        %v1659 = vpack.c.b16 %v1618, %v1617
        %v1660 = vpack.c.b16 %v1620, %v1619
        %v1661 = vpack.c.b16 %v1622, %v1621
        %v1662 = vpack.c.b16 %v1624, %v1623
        %v1663 = vpack.c.b16 %v1626, %v1625
        %v1664 = vpack.c.b16 %v1628, %v1627
        %v1665 = vpack.c.b16 %v1630, %v1629
        %v1666 = vpack.c.b16 %v1632, %v1631
        %v1667 = vpack.c.b16 %v1634, %v1633
        %v1668 = vpack.c.b16 %v1636, %v1635
        %v1669 = vpack.c.b16 %v1638, %v1637
        %v1670 = vpack.c.b16 %v1640, %v1639
        %v1671 = vpack.c.b16 %v1642, %v1641
        %v1672 = vpack.c.b16 %v1644, %v1643
        %v1673 = vpack.c.b16 %v1646, %v1645
        %v1674 = vpack.c.b16 %v1648, %v1647
        %v1675 = vpack.c.b16 %v1650, %v1649
        %v1676 = vpack.c.b16 %v1652, %v1651
        %1701 = vmatprep.subr.bf16.mxu0 0
        %1702 = vmatpush1.bf16.msra.mxu0 %v1653
        %1703 = vmatprep.subr.bf16.mxu0 0
        %1704 = vmatpush1.bf16.msra.mxu0 %v1654
        %1705 = vmatprep.subr.bf16.mxu0 0
        %1706 = vmatpush1.bf16.msra.mxu0 %v1655
        %1707 = vmatprep.subr.bf16.mxu0 0
        %1708 = vmatpush1.bf16.msra.mxu0 %v1656
        %1709 = vmatprep.subr.bf16.mxu0 0
        %1710 = vmatpush1.bf16.msra.mxu0 %v1657
        %1711 = vmatprep.subr.bf16.mxu0 0
        %1712 = vmatpush1.bf16.msra.mxu0 %v1658
        %1713 = vmatprep.subr.bf16.mxu0 0
        %1714 = vmatpush1.bf16.msra.mxu0 %v1659
        %1715 = vmatprep.subr.bf16.mxu0 0
        %1716 = vmatpush1.bf16.msra.mxu0 %v1660
        %1717 = vmatprep.subr.bf16.mxu0 0
        %1718 = vmatpush1.bf16.msra.mxu0 %v1661
        %1719 = vmatprep.subr.bf16.mxu0 0
        %1720 = vmatpush1.bf16.msra.mxu0 %v1662
        %1721 = vmatprep.subr.bf16.mxu0 0
        %1722 = vmatpush1.bf16.msra.mxu0 %v1663
        %1723 = vmatprep.subr.bf16.mxu0 0
        %1724 = vmatpush1.bf16.msra.mxu0 %v1664
        %1725 = vmatprep.subr.bf16.mxu0 0
        %1726 = vmatpush1.bf16.msra.mxu0 %v1665
        %1727 = vmatprep.subr.bf16.mxu0 0
        %1728 = vmatpush1.bf16.msra.mxu0 %v1666
        %1729 = vmatprep.subr.bf16.mxu0 0
        %1730 = vmatpush1.bf16.msra.mxu0 %v1667
        %1731 = vmatprep.subr.bf16.mxu0 0
        %1732 = vmatpush1.bf16.msra.mxu0 %v1668
        %1733 = vmatprep.mubr.bf16.mxu0 %v1202
        %1734 = vmatmul.mubr.bf16.gmra.mrb[0].mxu0 %v889
        %v1735 = vpop.f32.mrb[0].mxu0
        %v1736 = vadd.f32 %v1555, %v1735
        %v1737 = vpop.f32.mrb[0].mxu0
        %v1738 = vpop.f32.mrb[0].mxu0
        %v1739 = vadd.f32 %v1555, %v1738
        %v1740 = vpop.f32.mrb[0].mxu0
        %1741 = vdwg.mxu0
        %1742 = vmatprep.subr.bf16.mxu0 0
        %1743 = vmatpush1.bf16.msra.mxu0 %v1669
        %1744 = vmatprep.subr.bf16.mxu0 0
        %1745 = vmatpush1.bf16.msra.mxu0 %v1670
        %1746 = vmatprep.subr.bf16.mxu0 0
        %1747 = vmatpush1.bf16.msra.mxu0 %v1671
        %1748 = vmatprep.subr.bf16.mxu0 0
        %1749 = vmatpush1.bf16.msra.mxu0 %v1672
        %1750 = vmatprep.subr.bf16.mxu0 0
        %1751 = vmatpush1.bf16.msra.mxu0 %v1673
        %1752 = vmatprep.subr.bf16.mxu0 0
        %1753 = vmatpush1.bf16.msra.mxu0 %v1674
        %1754 = vmatprep.subr.bf16.mxu0 0
        %1755 = vmatpush1.bf16.msra.mxu0 %v1675
        %1756 = vmatprep.subr.bf16.mxu0 0
        %1757 = vmatpush1.bf16.msra.mxu0 %v1676
        %1758 = vmatprep.subr.bf16.mxu0 0
        %1759 = vmatpush1.bf16.msra.mxu0 0
        %1760 = vmatprep.subr.bf16.mxu0 0
        %1761 = vmatpush1.bf16.msra.mxu0 0
        %1762 = vmatprep.subr.bf16.mxu0 0
        %1763 = vmatpush1.bf16.msra.mxu0 0
        %1764 = vmatprep.subr.bf16.mxu0 0
        %1765 = vmatpush1.bf16.msra.mxu0 0
        %1766 = vmatprep.subr.bf16.mxu0 0
        %1767 = vmatpush1.bf16.msra.mxu0 0
        %1768 = vmatprep.subr.bf16.mxu0 0
        %1769 = vmatpush1.bf16.msra.mxu0 0
        %1770 = vmatprep.subr.bf16.mxu0 0
        %1771 = vmatpush1.bf16.msra.mxu0 0
        %1772 = vmatprep.subr.bf16.mxu0 0
        %1773 = vmatpush1.bf16.msra.mxu0 0
        %1774 = vmatprep.mubr.bf16.mxu0 0
        %1775 = vmatmul.mubr.bf16.gmra.mrb[0].mxu0 %v1501
        %v1776 = vpop.f32.mrb[0].mxu0
        %v1777 = vadd.f32 %v1736, %v1776
        %v1778 = vpop.f32.mrb[0].mxu0
        %v1779 = vpop.f32.mrb[0].mxu0
        %v1780 = vadd.f32 %v1739, %v1779
        %v1781 = vpop.f32.mrb[0].mxu0
        %1782 = vdwg.mxu0
        %1783 = vmax.xlane.f32.xlu0 %v1777
        %v1784 = vpop.xlane.xlu0 %1783
        %1785 = vmax.xlane.f32.xlu0 %v1780
        %v1786 = vpop.xlane.xlu0 %1785
        %v1787 = vsub.f32 %v1777, %v1784
        %v1788 = vsub.f32 %v1780, %v1786
        %v1789 = vmul.f32 %v1787, 1.442695
        %v1790 = vpow.pop %v1789
        %v1791 = vmul.f32 %v1788, 1.442695
        %v1792 = vpow.pop %v1791
        %1793 = vadd.xlane.f32.xlu0 %v1790
        %v1794 = vpop.xlane.xlu0 %1793
        %1795 = vadd.xlane.f32.xlu0 %v1792
        %v1796 = vpop.xlane.xlu0 %1795
        %v1797 = vlog2.pop %v1794
        %v1798 = vmul.f32 %v1797, 0.6931472
        %v1799 = vlog2.pop %v1796
        %v1800 = vmul.f32 %v1799, 0.6931472
        %v1801 = vadd.f32 %v1784, %v1798
        %v1802 = vadd.f32 %v1786, %v1800
        %v1803 = vsub.f32 %v1777, %v1801
        %v1804 = vsub.f32 %v1780, %v1802
        %1805 = vst [vmem:[%s445] sm:$0xff] %v1803
        %1806 = vst [vmem:[%s445 + $0x8] sm:$0xff] %v1804
        %s1807 = smul.u32 2, %s18
        %p1808 = scmp.lt.s32.totalorder %s1807, 3
        %s1809 = scalar_select %p1808, %s1807, 3
        %s1810 = smul.addr %s1809, 8
        %s1811 = scalar_lea.vmem %s7, %s1810
        // Predicated region
        $region90: #{ibmcnn_forward.1} parent=84 // pred_check
          %p1812 = pneg %p188
        $region91: #{ibmcnn_forward.1} parent=84 // pred_check_branch
          %1814 = sbr.rel (%p1812) target = $region93
        $region92: #{ibmcnn_forward.1} parent=84 // pred_region
          %s1815 = smul.u32 2, %s18
        $region93: #{ibmcnn_forward.1} parent=84 // pred_fallthru
          _
      $region85: #{ibmcnn_forward.1} parent=5 // pred_fallthru
        _
      %p1816 = scmp.le.s32.totalorder 2, %s13
      // Predicated region
      $region94: #{ibmcnn_forward.1} parent=5 // pred_check
        %p1817 = pneg %p1816
      $region95: #{ibmcnn_forward.1} parent=5 // pred_check_branch
        %1819 = sbr.rel (%p1817) target = $region97
      $region96: #{ibmcnn_forward.1} parent=5 // pred_region
        %s1820 = ssub.s32 %s13, 2
        // Predicated region
        $region98: #{ibmcnn_forward.1} parent=96 // pred_check
          %p1821 = pneg %p194
        $region99: #{ibmcnn_forward.1} parent=96 // pred_check_branch
          %1823 = sbr.rel (%p1821) target = $region101
        $region100: #{ibmcnn_forward.1} parent=96 // pred_region
          %s1824 = smul.u32 2, %s19
          %p1825 = scmp.lt.s32.totalorder %s1824, 3
          %s1826 = scalar_select %p1825, %s1824, 3
          %s1827 = smul.addr %s1826, 8
          %s1828 = scalar_lea.vmem %s7, %s1827
        $region101: #{ibmcnn_forward.1} parent=96 // pred_fallthru
          _
      $region97: #{ibmcnn_forward.1} parent=5 // pred_fallthru
        _
    $region6: #{ibmcnn_forward.1} parent=1 // loop_footer
      %s17 = sadd.s32 1, %s13
    $region7: #{ibmcnn_forward.1} parent=1 // loop_footer_branch
      %12 = sbr.rel target = $region3
    $region8: #{ibmcnn_forward.1} parent=1 // loop_exit
      _

</llo_original>
